<compile_context>
chip_gen: v6e
topology: v6e:2x2x1
jax: 0.10.0
libtpu: 0.0.40
codegen_flags: <defaults>
</compile_context>

<pallas_src>
import functools

import jax
import jax.numpy as jnp
from jax import lax
from jax.experimental import pallas as pl
from jax.experimental.pallas import tpu as pltpu


def _attn_kernel(x_ref, wqkv_ref, bqkv_ref, wo_ref, bo_ref, *rest,
                 with_attw, num_heads, head_dim, q_tile, exact_recip):
    if with_attw:
        out_ref, attw_ref, qkv_ref, ctx_ref = rest
    else:
        out_ref, qkv_ref, ctx_ref = rest
        attw_ref = None

    S, D = x_ref.shape[1], x_ref.shape[2]
    cdt = x_ref.dtype  # compute / operand dtype (bf16 stays bf16, f32 stays f32)

    # 1) Fused QKV projection once per batch element: (S, D) @ (D, 3D).
    #    The softmax scale is already folded into the Q columns (wrapper).
    x = x_ref[0]                                                     # (S, D)
    qkv_ref[...] = (
        jnp.dot(x, wqkv_ref[...], preferred_element_type=jnp.float32)
        + bqkv_ref[...]
    ).astype(cdt)                                                    # (S, 3D)

    n_q = pl.cdiv(S, q_tile)

    # 2) Per-head attention with query tiling (static head loop -> static
    #    lane-dim column slices of the qkv scratch).
    for h in range(num_heads):
        q_lo = h * head_dim
        k_lo = D + h * head_dim
        v_lo = 2 * D + h * head_dim

        def q_tile_body(qi, q_lo=q_lo, k_lo=k_lo, v_lo=v_lo, h=h):
            # Last tile is clamped so it ends exactly at S; overlapping rows
            # are recomputed and rewritten with identical values (correct).
            r0 = jnp.minimum(qi * q_tile, S - q_tile)
            q_t = qkv_ref[pl.ds(r0, q_tile), q_lo:q_lo + head_dim]   # (tq, hd)
            k_h = qkv_ref[:, k_lo:k_lo + head_dim]                   # (S, hd)
            v_h = qkv_ref[:, v_lo:v_lo + head_dim]                   # (S, hd)

            # (tq, S) scores: contract last dims -> no materialized k.T.
            scores = lax.dot_general(
                q_t, k_h, (((1,), (1,)), ((), ())),
                preferred_element_type=jnp.float32)

            # softmax statistics in float32 (torch softmax(dtype=float32)).
            m = jnp.max(scores, axis=-1, keepdims=True)
            e = jnp.exp(scores - m)
            den = jnp.sum(e, axis=-1, keepdims=True)
            if exact_recip:
                p32 = e / den                              # exact for f32 inputs
            else:
                p32 = e * pl.reciprocal(den, approx=True)  # EUP slot, ~2^-12 rel
            p = p32.astype(cdt)                            # torch: .to(query.dtype)
            # attention_dropout == 0.0 -> identity (no dropout applied)

            if attw_ref is not None:
                attw_ref[0, h, pl.ds(r0, q_tile), :] = p.astype(attw_ref.dtype)

            ctx = jnp.dot(p, v_h, preferred_element_type=jnp.float32).astype(cdt)
            ctx_ref[pl.ds(r0, q_tile), q_lo:q_lo + head_dim] = ctx

        if n_q == 1:
            q_tile_body(0)
        else:
            def _loop(qi, carry):
                q_tile_body(qi)
                return carry
            lax.fori_loop(0, n_q, _loop, 0, unroll=False)

    # 3) ONE merged output projection: (S, D) @ (D, D) with K = D (full MXU
    #    depth) instead of H small per-head accumulating matmuls.
    out = jnp.dot(ctx_ref[...], wo_ref[...],
                  preferred_element_type=jnp.float32) + bo_ref[...]
    out_ref[0] = out.astype(out_ref.dtype)


def siglip_attention(hidden_states, params, *, num_heads, return_attn_weights=True):
    """hidden_states: (B, S, D). Returns (attn_output, attn_weights | None)."""
    B, S, D = hidden_states.shape
    hd = D // num_heads
    assert hd * num_heads == D
    scale = hd ** -0.5
    dtype = hidden_states.dtype
    itemsize = jnp.dtype(dtype).itemsize

    wq, bq = params["q"]
    wk, bk = params["k"]
    wv, bv = params["v"]
    wo, bo = params["o"]

    # ---- wrapper-side packing (free): fold softmax scale into Q -------------
    wqkv = jnp.concatenate([wq * scale, wk, wv], axis=1).astype(dtype)   # (D, 3D)
    bqkv = jnp.concatenate([bq * scale, bk, bv], axis=1).astype(dtype)   # (1, 3D)
    wo = wo.astype(dtype)                                                # (D, D)
    bo = bo.astype(dtype)                                                # (1, D)

    q_tile = S if S <= 128 else 128
    exact_recip = jnp.dtype(dtype) == jnp.dtype(jnp.float32)

    grid = (B,)
    in_specs = [
        pl.BlockSpec((1, S, D), lambda b: (b, 0, 0)),     # hidden_states (per batch)
        pl.BlockSpec((D, 3 * D), lambda b: (0, 0)),       # fused QKV weight (resident)
        pl.BlockSpec((1, 3 * D), lambda b: (0, 0)),       # fused QKV bias   (resident)
        pl.BlockSpec((D, D), lambda b: (0, 0)),           # out_proj weight  (resident)
        pl.BlockSpec((1, D), lambda b: (0, 0)),           # out_proj bias    (resident)
    ]
    out_spec_o = pl.BlockSpec((1, S, D), lambda b: (b, 0, 0))

    scratch = [pltpu.VMEM((S, 3 * D), dtype),   # fused qkv activations
               pltpu.VMEM((S, D), dtype)]       # per-head contexts (column slices)

    # Advisory cost estimate for XLA scheduling.
    flops = (2 * B * S * D * 3 * D                  # QKV projection
             + 4 * B * num_heads * S * S * hd       # scores + probs@V
             + 2 * B * S * D * D)                   # merged output projection
    transcendentals = B * num_heads * S * S
    bytes_accessed = itemsize * (2 * B * S * D + 4 * D * D + 4 * D)
    if return_attn_weights:
        bytes_accessed += itemsize * B * num_heads * S * S
    cost = pl.CostEstimate(flops=int(flops), transcendentals=int(transcendentals),
                           bytes_accessed=int(bytes_accessed))

    # VMEM residency estimate (with margin). Only raise the scoped limit when
    # the default (~32 MiB) would not fit; keep a hard cap below v7x's 64 MiB.
    vmem_est = itemsize * (2 * S * D                 # x (double-buffered)
                           + 2 * S * D               # out
                           + 4 * D * D + 4 * D       # resident weights / biases
                           + S * 3 * D + S * D)      # scratch
    if return_attn_weights:
        vmem_est += itemsize * 2 * num_heads * S * S
    vmem_est += 3 * q_tile * S * 4 + (2 << 20)       # f32 score/exp tiles + margin
    vmem_limit = int(min(vmem_est * 1.25, 60 << 20)) if vmem_est > (32 << 20) else None

    cparams = pltpu.CompilerParams(
        dimension_semantics=("parallel",),
        vmem_limit_bytes=vmem_limit)

    kern = functools.partial(_attn_kernel, with_attw=return_attn_weights,
                             num_heads=num_heads, head_dim=hd,
                             q_tile=q_tile, exact_recip=exact_recip)

    if return_attn_weights:
        out, attw = pl.pallas_call(
            kern,
            out_shape=(jax.ShapeDtypeStruct((B, S, D), dtype),
                       jax.ShapeDtypeStruct((B, num_heads, S, S), dtype)),
            grid_spec=pltpu.PrefetchScalarGridSpec(
                num_scalar_prefetch=0, grid=grid,
                in_specs=in_specs,
                out_specs=(out_spec_o,
                           pl.BlockSpec((1, num_heads, S, S),
                                        lambda b: (b, 0, 0, 0))),
                scratch_shapes=scratch),
            compiler_params=cparams,
            cost_estimate=cost,
        )(hidden_states, wqkv, bqkv, wo, bo)
        return out, attw

    out = pl.pallas_call(
        kern,
        out_shape=jax.ShapeDtypeStruct((B, S, D), dtype),
        grid_spec=pltpu.PrefetchScalarGridSpec(
            num_scalar_prefetch=0, grid=grid,
            in_specs=in_specs,
            out_specs=out_spec_o,
            scratch_shapes=scratch),
        compiler_params=cparams,
        cost_estimate=cost,
    )(hidden_states, wqkv, bqkv, wo, bo)
    return out, None


def _reference(hidden_states, params, *, num_heads):
    """Pure-JAX reference mirroring the PyTorch forward exactly."""
    B, S, D = hidden_states.shape
    hd = D // num_heads
    scale = hd ** -0.5

    def lin(x, wb):
        w, b = wb
        return x @ w + b[0]

    q = lin(hidden_states, params["q"]).reshape(B, S, num_heads, hd).transpose(0, 2, 1, 3)
    k = lin(hidden_states, params["k"]).reshape(B, S, num_heads, hd).transpose(0, 2, 1, 3)
    v = lin(hidden_states, params["v"]).reshape(B, S, num_heads, hd).transpose(0, 2, 1, 3)

    scores = jnp.einsum("bhqd,bhkd->bhqk", q, k) * scale
    probs = jax.nn.softmax(scores.astype(jnp.float32), axis=-1).astype(q.dtype)
    attn = jnp.einsum("bhqk,bhkd->bhqd", probs, v)
    attn = attn.transpose(0, 2, 1, 3).reshape(B, S, D)
    out = lin(attn, params["o"])
    return out, probs


if __name__ == "__main__":
    # Small config consistent with the module: embed_dim=32, 4 heads, seq=16 patches.
    B, S, D, H = 2, 16, 32, 4

    key = jax.random.PRNGKey(0)
    keys = jax.random.split(key, 9)

    def init_linear(kw, kb):
        w = jax.random.normal(kw, (D, D), jnp.float32) * (1.0 / jnp.sqrt(D))
        b = jax.random.normal(kb, (1, D), jnp.float32) * 0.01
        return w, b

    params = {
        "q": init_linear(keys[0], keys[1]),
        "k": init_linear(keys[2], keys[3]),
        "v": init_linear(keys[4], keys[5]),
        "o": init_linear(keys[6], keys[7]),
    }
    x = jax.random.normal(keys[8], (B, S, D), jnp.float32)

    # Full module semantics: returns (attn_output, attn_weights).
    out, attw = siglip_attention(x, params, num_heads=H, return_attn_weights=True)
    out = jax.block_until_ready(out)
    attw = jax.block_until_ready(attw)

    # Production fast path: no (B, H, S, S) attention-weights writeback.
    out_fast, attw_none = siglip_attention(x, params, num_heads=H,
                                           return_attn_weights=False)
    out_fast = jax.block_until_ready(out_fast)

    ref_out, ref_attw = _reference(x, params, num_heads=H)
    assert out.shape == (B, S, D)
    assert attw.shape == (B, H, S, S)
    assert attw_none is None
    assert jnp.allclose(out, ref_out, atol=2e-3, rtol=2e-3), \
        float(jnp.max(jnp.abs(out - ref_out)))
    assert jnp.allclose(out_fast, ref_out, atol=2e-3, rtol=2e-3)
    assert jnp.allclose(attw, ref_attw, atol=2e-3, rtol=2e-3)

    print("KERNEL_OK")
</pallas_src>

<mosaic_0001>
module attributes {stable_mosaic.version = 11 : i64} {
  func.func @_attn_kernel(%arg0: i32, %arg1: memref<1x16x32xf32, #tpu.memory_space<vmem>>, %arg2: memref<32x96xf32, #tpu.memory_space<vmem>>, %arg3: memref<1x96xf32, #tpu.memory_space<vmem>>, %arg4: memref<32x32xf32, #tpu.memory_space<vmem>>, %arg5: memref<1x32xf32, #tpu.memory_space<vmem>>, %arg6: memref<1x16x32xf32, #tpu.memory_space<vmem>>, %arg7: memref<1x4x16x16xf32, #tpu.memory_space<vmem>>, %arg8: memref<16x96xf32, #tpu.memory_space<vmem>>, %arg9: memref<16x32xf32, #tpu.memory_space<vmem>>) attributes {dimension_semantics = [#tpu.dimension_semantics<parallel>], iteration_bounds = array<i64: 2>, scalar_prefetch = 0 : i64, scratch_operands = 2 : i64, tpu.core_type = #tpu.core_type<tc>, window_params = [{transform_indices = @transform_0, window_bounds = array<i64: 1, 16, 32>}, {pipeline_mode = #tpu.pipeline_mode<synchronous>, transform_indices = @transform_1, window_bounds = array<i64: 32, 96>}, {pipeline_mode = #tpu.pipeline_mode<synchronous>, transform_indices = @transform_2, window_bounds = array<i64: 1, 96>}, {pipeline_mode = #tpu.pipeline_mode<synchronous>, transform_indices = @transform_3, window_bounds = array<i64: 32, 32>}, {pipeline_mode = #tpu.pipeline_mode<synchronous>, transform_indices = @transform_4, window_bounds = array<i64: 1, 32>}, {transform_indices = @transform_5, window_bounds = array<i64: 1, 16, 32>}, {transform_indices = @transform_6, window_bounds = array<i64: 1, 4, 16, 16>}]} {
    %c0 = arith.constant 0 : index
    %c0_0 = arith.constant 0 : index
    %c0_1 = arith.constant 0 : index
    %0 = vector.load %arg1[%c0, %c0_0, %c0_1] : memref<1x16x32xf32, #tpu.memory_space<vmem>>, vector<1x16x32xf32>
    %1 = vector.shape_cast %0 : vector<1x16x32xf32> to vector<16x32xf32>
    %c0_2 = arith.constant 0 : index
    %c0_3 = arith.constant 0 : index
    %2 = vector.load %arg2[%c0_2, %c0_3] : memref<32x96xf32, #tpu.memory_space<vmem>>, vector<32x96xf32>
    %cst = arith.constant dense<0.000000e+00> : vector<16x96xf32>
    %3 = tpu.matmul %1, %2, %cst {dimension_numbers = #tpu.dot_dimension_numbers<[1], [0], [0], [1], [0, 0, 1, 1], [], []>} : vector<16x32xf32>, vector<32x96xf32>, vector<16x96xf32> -> vector<16x96xf32>
    %c0_4 = arith.constant 0 : index
    %c0_5 = arith.constant 0 : index
    %4 = vector.load %arg3[%c0_4, %c0_5] : memref<1x96xf32, #tpu.memory_space<vmem>>, vector<1x96xf32>
    %5 = vector.broadcast %4 : vector<1x96xf32> to vector<16x96xf32>
    %6 = arith.addf %3, %5 : vector<16x96xf32>
    %c0_6 = arith.constant 0 : index
    %c0_7 = arith.constant 0 : index
    %7 = vector.load %arg8[%c0_6, %c0_7] : memref<16x96xf32, #tpu.memory_space<vmem>>, vector<16x96xf32>
    tpu.vector_store %arg8[%c0_6, %c0_7], %6 {strides = array<i32>} : memref<16x96xf32, #tpu.memory_space<vmem>>, vector<16x96xf32>,
    %c0_i32 = arith.constant 0 : i32
    %c0_i32_8 = arith.constant 0 : i32
    %8 = arith.minsi %c0_i32, %c0_i32_8 : i32
    %9 = arith.index_cast %8 : i32 to index
    %c0_9 = arith.constant 0 : index
    %10 = vector.load %arg8[%9, %c0_9] : memref<16x96xf32, #tpu.memory_space<vmem>>, vector<16x8xf32>
    %c0_10 = arith.constant 0 : index
    %c32 = arith.constant 32 : index
    %11 = vector.load %arg8[%c0_10, %c32] : memref<16x96xf32, #tpu.memory_space<vmem>>, vector<16x8xf32>
    %c0_11 = arith.constant 0 : index
    %c64 = arith.constant 64 : index
    %12 = vector.load %arg8[%c0_11, %c64] : memref<16x96xf32, #tpu.memory_space<vmem>>, vector<16x8xf32>
    %cst_12 = arith.constant dense<0.000000e+00> : vector<16x16xf32>
    %13 = tpu.matmul %10, %11, %cst_12 {dimension_numbers = #tpu.dot_dimension_numbers<[1], [1], [0], [0], [0, 0, 1, 0], [], []>} : vector<16x8xf32>, vector<16x8xf32>, vector<16x16xf32> -> vector<16x16xf32>
    %cst_13 = arith.constant dense<0xFF800000> : vector<16xf32>
    %14 = vector.multi_reduction <maximumf>, %13, %cst_13 [1] : vector<16x16xf32> to vector<16xf32>
    %15 = vector.shape_cast %14 : vector<16xf32> to vector<16x1xf32>
    %16 = vector.broadcast %15 : vector<16x1xf32> to vector<16x16xf32>
    %17 = arith.subf %13, %16 : vector<16x16xf32>
    %18 = math.exp %17 : vector<16x16xf32>
    %cst_14 = arith.constant dense<0.000000e+00> : vector<16xf32>
    %19 = vector.multi_reduction <add>, %18, %cst_14 [1] : vector<16x16xf32> to vector<16xf32>
    %20 = vector.shape_cast %19 : vector<16xf32> to vector<16x1xf32>
    %21 = vector.broadcast %20 : vector<16x1xf32> to vector<16x16xf32>
    %22 = arith.divf %18, %21 : vector<16x16xf32>
    %c0_15 = arith.constant 0 : index
    %c0_16 = arith.constant 0 : index
    %23 = arith.index_cast %8 : i32 to index
    %c0_17 = arith.constant 0 : index
    %24 = vector.load %arg7[%c0_15, %c0_16, %23, %c0_17] : memref<1x4x16x16xf32, #tpu.memory_space<vmem>>, vector<1x1x16x16xf32>
    %25 = vector.shape_cast %24 : vector<1x1x16x16xf32> to vector<16x16xf32>
    %26 = vector.shape_cast %22 : vector<16x16xf32> to vector<1x1x16x16xf32>
    tpu.vector_store %arg7[%c0_15, %c0_16, %23, %c0_17], %26 {strides = array<i32>} : memref<1x4x16x16xf32, #tpu.memory_space<vmem>>, vector<1x1x16x16xf32>,
    %cst_18 = arith.constant dense<0.000000e+00> : vector<16x8xf32>
    %27 = tpu.matmul %22, %12, %cst_18 {dimension_numbers = #tpu.dot_dimension_numbers<[1], [0], [0], [1], [0, 0, 1, 1], [], []>} : vector<16x16xf32>, vector<16x8xf32>, vector<16x8xf32> -> vector<16x8xf32>
    %28 = arith.index_cast %8 : i32 to index
    %c0_19 = arith.constant 0 : index
    %29 = vector.load %arg9[%28, %c0_19] : memref<16x32xf32, #tpu.memory_space<vmem>>, vector<16x8xf32>
    tpu.vector_store %arg9[%28, %c0_19], %27 {strides = array<i32>} : memref<16x32xf32, #tpu.memory_space<vmem>>, vector<16x8xf32>,
    %c0_i32_20 = arith.constant 0 : i32
    %c0_i32_21 = arith.constant 0 : i32
    %30 = arith.minsi %c0_i32_20, %c0_i32_21 : i32
    %31 = arith.index_cast %30 : i32 to index
    %c8 = arith.constant 8 : index
    %32 = vector.load %arg8[%31, %c8] : memref<16x96xf32, #tpu.memory_space<vmem>>, vector<16x8xf32>
    %c0_22 = arith.constant 0 : index
    %c40 = arith.constant 40 : index
    %33 = vector.load %arg8[%c0_22, %c40] : memref<16x96xf32, #tpu.memory_space<vmem>>, vector<16x8xf32>
    %c0_23 = arith.constant 0 : index
    %c72 = arith.constant 72 : index
    %34 = vector.load %arg8[%c0_23, %c72] : memref<16x96xf32, #tpu.memory_space<vmem>>, vector<16x8xf32>
    %cst_24 = arith.constant dense<0.000000e+00> : vector<16x16xf32>
    %35 = tpu.matmul %32, %33, %cst_24 {dimension_numbers = #tpu.dot_dimension_numbers<[1], [1], [0], [0], [0, 0, 1, 0], [], []>} : vector<16x8xf32>, vector<16x8xf32>, vector<16x16xf32> -> vector<16x16xf32>
    %cst_25 = arith.constant dense<0xFF800000> : vector<16xf32>
    %36 = vector.multi_reduction <maximumf>, %35, %cst_25 [1] : vector<16x16xf32> to vector<16xf32>
    %37 = vector.shape_cast %36 : vector<16xf32> to vector<16x1xf32>
    %38 = vector.broadcast %37 : vector<16x1xf32> to vector<16x16xf32>
    %39 = arith.subf %35, %38 : vector<16x16xf32>
    %40 = math.exp %39 : vector<16x16xf32>
    %cst_26 = arith.constant dense<0.000000e+00> : vector<16xf32>
    %41 = vector.multi_reduction <add>, %40, %cst_26 [1] : vector<16x16xf32> to vector<16xf32>
    %42 = vector.shape_cast %41 : vector<16xf32> to vector<16x1xf32>
    %43 = vector.broadcast %42 : vector<16x1xf32> to vector<16x16xf32>
    %44 = arith.divf %40, %43 : vector<16x16xf32>
    %c0_27 = arith.constant 0 : index
    %c1 = arith.constant 1 : index
    %45 = arith.index_cast %30 : i32 to index
    %c0_28 = arith.constant 0 : index
    %46 = vector.load %arg7[%c0_27, %c1, %45, %c0_28] : memref<1x4x16x16xf32, #tpu.memory_space<vmem>>, vector<1x1x16x16xf32>
    %47 = vector.shape_cast %46 : vector<1x1x16x16xf32> to vector<16x16xf32>
    %48 = vector.shape_cast %44 : vector<16x16xf32> to vector<1x1x16x16xf32>
    tpu.vector_store %arg7[%c0_27, %c1, %45, %c0_28], %48 {strides = array<i32>} : memref<1x4x16x16xf32, #tpu.memory_space<vmem>>, vector<1x1x16x16xf32>,
    %cst_29 = arith.constant dense<0.000000e+00> : vector<16x8xf32>
    %49 = tpu.matmul %44, %34, %cst_29 {dimension_numbers = #tpu.dot_dimension_numbers<[1], [0], [0], [1], [0, 0, 1, 1], [], []>} : vector<16x16xf32>, vector<16x8xf32>, vector<16x8xf32> -> vector<16x8xf32>
    %50 = arith.index_cast %30 : i32 to index
    %c8_30 = arith.constant 8 : index
    %51 = vector.load %arg9[%50, %c8_30] : memref<16x32xf32, #tpu.memory_space<vmem>>, vector<16x8xf32>
    tpu.vector_store %arg9[%50, %c8_30], %49 {strides = array<i32>} : memref<16x32xf32, #tpu.memory_space<vmem>>, vector<16x8xf32>,
    %c0_i32_31 = arith.constant 0 : i32
    %c0_i32_32 = arith.constant 0 : i32
    %52 = arith.minsi %c0_i32_31, %c0_i32_32 : i32
    %53 = arith.index_cast %52 : i32 to index
    %c16 = arith.constant 16 : index
    %54 = vector.load %arg8[%53, %c16] : memref<16x96xf32, #tpu.memory_space<vmem>>, vector<16x8xf32>
    %c0_33 = arith.constant 0 : index
    %c48 = arith.constant 48 : index
    %55 = vector.load %arg8[%c0_33, %c48] : memref<16x96xf32, #tpu.memory_space<vmem>>, vector<16x8xf32>
    %c0_34 = arith.constant 0 : index
    %c80 = arith.constant 80 : index
    %56 = vector.load %arg8[%c0_34, %c80] : memref<16x96xf32, #tpu.memory_space<vmem>>, vector<16x8xf32>
    %cst_35 = arith.constant dense<0.000000e+00> : vector<16x16xf32>
    %57 = tpu.matmul %54, %55, %cst_35 {dimension_numbers = #tpu.dot_dimension_numbers<[1], [1], [0], [0], [0, 0, 1, 0], [], []>} : vector<16x8xf32>, vector<16x8xf32>, vector<16x16xf32> -> vector<16x16xf32>
    %cst_36 = arith.constant dense<0xFF800000> : vector<16xf32>
    %58 = vector.multi_reduction <maximumf>, %57, %cst_36 [1] : vector<16x16xf32> to vector<16xf32>
    %59 = vector.shape_cast %58 : vector<16xf32> to vector<16x1xf32>
    %60 = vector.broadcast %59 : vector<16x1xf32> to vector<16x16xf32>
    %61 = arith.subf %57, %60 : vector<16x16xf32>
    %62 = math.exp %61 : vector<16x16xf32>
    %cst_37 = arith.constant dense<0.000000e+00> : vector<16xf32>
    %63 = vector.multi_reduction <add>, %62, %cst_37 [1] : vector<16x16xf32> to vector<16xf32>
    %64 = vector.shape_cast %63 : vector<16xf32> to vector<16x1xf32>
    %65 = vector.broadcast %64 : vector<16x1xf32> to vector<16x16xf32>
    %66 = arith.divf %62, %65 : vector<16x16xf32>
    %c0_38 = arith.constant 0 : index
    %c2 = arith.constant 2 : index
    %67 = arith.index_cast %52 : i32 to index
    %c0_39 = arith.constant 0 : index
    %68 = vector.load %arg7[%c0_38, %c2, %67, %c0_39] : memref<1x4x16x16xf32, #tpu.memory_space<vmem>>, vector<1x1x16x16xf32>
    %69 = vector.shape_cast %68 : vector<1x1x16x16xf32> to vector<16x16xf32>
    %70 = vector.shape_cast %66 : vector<16x16xf32> to vector<1x1x16x16xf32>
    tpu.vector_store %arg7[%c0_38, %c2, %67, %c0_39], %70 {strides = array<i32>} : memref<1x4x16x16xf32, #tpu.memory_space<vmem>>, vector<1x1x16x16xf32>,
    %cst_40 = arith.constant dense<0.000000e+00> : vector<16x8xf32>
    %71 = tpu.matmul %66, %56, %cst_40 {dimension_numbers = #tpu.dot_dimension_numbers<[1], [0], [0], [1], [0, 0, 1, 1], [], []>} : vector<16x16xf32>, vector<16x8xf32>, vector<16x8xf32> -> vector<16x8xf32>
    %72 = arith.index_cast %52 : i32 to index
    %c16_41 = arith.constant 16 : index
    %73 = vector.load %arg9[%72, %c16_41] : memref<16x32xf32, #tpu.memory_space<vmem>>, vector<16x8xf32>
    tpu.vector_store %arg9[%72, %c16_41], %71 {strides = array<i32>} : memref<16x32xf32, #tpu.memory_space<vmem>>, vector<16x8xf32>,
    %c0_i32_42 = arith.constant 0 : i32
    %c0_i32_43 = arith.constant 0 : i32
    %74 = arith.minsi %c0_i32_42, %c0_i32_43 : i32
    %75 = arith.index_cast %74 : i32 to index
    %c24 = arith.constant 24 : index
    %76 = vector.load %arg8[%75, %c24] : memref<16x96xf32, #tpu.memory_space<vmem>>, vector<16x8xf32>
    %c0_44 = arith.constant 0 : index
    %c56 = arith.constant 56 : index
    %77 = vector.load %arg8[%c0_44, %c56] : memref<16x96xf32, #tpu.memory_space<vmem>>, vector<16x8xf32>
    %c0_45 = arith.constant 0 : index
    %c88 = arith.constant 88 : index
    %78 = vector.load %arg8[%c0_45, %c88] : memref<16x96xf32, #tpu.memory_space<vmem>>, vector<16x8xf32>
    %cst_46 = arith.constant dense<0.000000e+00> : vector<16x16xf32>
    %79 = tpu.matmul %76, %77, %cst_46 {dimension_numbers = #tpu.dot_dimension_numbers<[1], [1], [0], [0], [0, 0, 1, 0], [], []>} : vector<16x8xf32>, vector<16x8xf32>, vector<16x16xf32> -> vector<16x16xf32>
    %cst_47 = arith.constant dense<0xFF800000> : vector<16xf32>
    %80 = vector.multi_reduction <maximumf>, %79, %cst_47 [1] : vector<16x16xf32> to vector<16xf32>
    %81 = vector.shape_cast %80 : vector<16xf32> to vector<16x1xf32>
    %82 = vector.broadcast %81 : vector<16x1xf32> to vector<16x16xf32>
    %83 = arith.subf %79, %82 : vector<16x16xf32>
    %84 = math.exp %83 : vector<16x16xf32>
    %cst_48 = arith.constant dense<0.000000e+00> : vector<16xf32>
    %85 = vector.multi_reduction <add>, %84, %cst_48 [1] : vector<16x16xf32> to vector<16xf32>
    %86 = vector.shape_cast %85 : vector<16xf32> to vector<16x1xf32>
    %87 = vector.broadcast %86 : vector<16x1xf32> to vector<16x16xf32>
    %88 = arith.divf %84, %87 : vector<16x16xf32>
    %c0_49 = arith.constant 0 : index
    %c3 = arith.constant 3 : index
    %89 = arith.index_cast %74 : i32 to index
    %c0_50 = arith.constant 0 : index
    %90 = vector.load %arg7[%c0_49, %c3, %89, %c0_50] : memref<1x4x16x16xf32, #tpu.memory_space<vmem>>, vector<1x1x16x16xf32>
    %91 = vector.shape_cast %90 : vector<1x1x16x16xf32> to vector<16x16xf32>
    %92 = vector.shape_cast %88 : vector<16x16xf32> to vector<1x1x16x16xf32>
    tpu.vector_store %arg7[%c0_49, %c3, %89, %c0_50], %92 {strides = array<i32>} : memref<1x4x16x16xf32, #tpu.memory_space<vmem>>, vector<1x1x16x16xf32>,
    %cst_51 = arith.constant dense<0.000000e+00> : vector<16x8xf32>
    %93 = tpu.matmul %88, %78, %cst_51 {dimension_numbers = #tpu.dot_dimension_numbers<[1], [0], [0], [1], [0, 0, 1, 1], [], []>} : vector<16x16xf32>, vector<16x8xf32>, vector<16x8xf32> -> vector<16x8xf32>
    %94 = arith.index_cast %74 : i32 to index
    %c24_52 = arith.constant 24 : index
    %95 = vector.load %arg9[%94, %c24_52] : memref<16x32xf32, #tpu.memory_space<vmem>>, vector<16x8xf32>
    tpu.vector_store %arg9[%94, %c24_52], %93 {strides = array<i32>} : memref<16x32xf32, #tpu.memory_space<vmem>>, vector<16x8xf32>,
    %c0_53 = arith.constant 0 : index
    %c0_54 = arith.constant 0 : index
    %96 = vector.load %arg9[%c0_53, %c0_54] : memref<16x32xf32, #tpu.memory_space<vmem>>, vector<16x32xf32>
    %c0_55 = arith.constant 0 : index
    %c0_56 = arith.constant 0 : index
    %97 = vector.load %arg4[%c0_55, %c0_56] : memref<32x32xf32, #tpu.memory_space<vmem>>, vector<32x32xf32>
    %cst_57 = arith.constant dense<0.000000e+00> : vector<16x32xf32>
    %98 = tpu.matmul %96, %97, %cst_57 {dimension_numbers = #tpu.dot_dimension_numbers<[1], [0], [0], [1], [0, 0, 1, 1], [], []>} : vector<16x32xf32>, vector<32x32xf32>, vector<16x32xf32> -> vector<16x32xf32>
    %c0_58 = arith.constant 0 : index
    %c0_59 = arith.constant 0 : index
    %99 = vector.load %arg5[%c0_58, %c0_59] : memref<1x32xf32, #tpu.memory_space<vmem>>, vector<1x32xf32>
    %100 = vector.broadcast %99 : vector<1x32xf32> to vector<16x32xf32>
    %101 = arith.addf %98, %100 : vector<16x32xf32>
    %c0_60 = arith.constant 0 : index
    %c0_61 = arith.constant 0 : index
    %c0_62 = arith.constant 0 : index
    %102 = vector.load %arg6[%c0_60, %c0_61, %c0_62] : memref<1x16x32xf32, #tpu.memory_space<vmem>>, vector<1x16x32xf32>
    %103 = vector.shape_cast %102 : vector<1x16x32xf32> to vector<16x32xf32>
    %104 = vector.shape_cast %101 : vector<16x32xf32> to vector<1x16x32xf32>
    tpu.vector_store %arg6[%c0_60, %c0_61, %c0_62], %104 {strides = array<i32>} : memref<1x16x32xf32, #tpu.memory_space<vmem>>, vector<1x16x32xf32>,
    return
  }
  func.func @transform_0(%arg0: i32) -> (i32, i32, i32) {
    %c0_i32 = arith.constant 0 : i32
    %c0_i32_0 = arith.constant 0 : i32
    %c0_i32_1 = arith.constant 0 : i32
    return %arg0, %c0_i32, %c0_i32_0 : i32, i32, i32
  }
  func.func @transform_1(%arg0: i32) -> (i32, i32) {
    %c0_i32 = arith.constant 0 : i32
    %c0_i32_0 = arith.constant 0 : i32
    %c0_i32_1 = arith.constant 0 : i32
    return %c0_i32, %c0_i32_0 : i32, i32
  }
  func.func @transform_2(%arg0: i32) -> (i32, i32) {
    %c0_i32 = arith.constant 0 : i32
    %c0_i32_0 = arith.constant 0 : i32
    %c0_i32_1 = arith.constant 0 : i32
    return %c0_i32, %c0_i32_0 : i32, i32
  }
  func.func @transform_3(%arg0: i32) -> (i32, i32) {
    %c0_i32 = arith.constant 0 : i32
    %c0_i32_0 = arith.constant 0 : i32
    %c0_i32_1 = arith.constant 0 : i32
    return %c0_i32, %c0_i32_0 : i32, i32
  }
  func.func @transform_4(%arg0: i32) -> (i32, i32) {
    %c0_i32 = arith.constant 0 : i32
    %c0_i32_0 = arith.constant 0 : i32
    %c0_i32_1 = arith.constant 0 : i32
    return %c0_i32, %c0_i32_0 : i32, i32
  }
  func.func @transform_5(%arg0: i32) -> (i32, i32, i32) {
    %c0_i32 = arith.constant 0 : i32
    %c0_i32_0 = arith.constant 0 : i32
    %c0_i32_1 = arith.constant 0 : i32
    return %arg0, %c0_i32, %c0_i32_0 : i32, i32, i32
  }
  func.func @transform_6(%arg0: i32) -> (i32, i32, i32, i32) {
    %c0_i32 = arith.constant 0 : i32
    %c0_i32_0 = arith.constant 0 : i32
    %c0_i32_1 = arith.constant 0 : i32
    %c0_i32_2 = arith.constant 0 : i32
    return %arg0, %c0_i32, %c0_i32_0, %c0_i32_1 : i32, i32, i32, i32
  }
}

</mosaic_0001>

<llo_original>
// kernel: tpu_custom_call.1
$region0: #{tpu_custom_call.1}
  #allocation0 [shape = 'u32[]', space=smem, size = 0x4, offset = 0x4, fixed_abs, tag = 'smem constant byte address 0x4 - core index']
  #allocation1 [shape = 'u32[144,128]{1,0:T(1,128)}', space=vmem, size = 0x12000, scoped, tag = 'internal scratch']
  #allocation2 [shape = 'f32[16,96]{1,0:T(8,128)}', space=vmem, size = 0x2000, scoped, tag = 'scratch operand']
  #allocation3 [shape = 'f32[16,32]{1,0:T(8,128)}', space=vmem, size = 0x2000, scoped, tag = 'scratch operand']
  %s0 = inlined_call_operand.hbm [shape: f32[2,16,32], index: 0, kind: input, shape index: {}]
  %s1 = inlined_call_operand.hbm [shape: f32[32,96], index: 1, kind: input, shape index: {}]
  %s2 = inlined_call_operand.vmem [shape: f32[1,96], index: 2, kind: input, shape index: {}]
  %s3 = inlined_call_operand.hbm [shape: f32[32,32], index: 3, kind: input, shape index: {}]
  %s4 = inlined_call_operand.vmem [shape: f32[1,32], index: 4, kind: input, shape index: {}]
  %s5 = inlined_call_operand.hbm [shape: f32[2,16,32], index: 5, kind: output, shape index: {0}]
  %s6 = inlined_call_operand.hbm [shape: f32[2,4,16,16], index: 6, kind: output, shape index: {1}]
  %7 = xla_tuple %s5, %s6
  %s8 = sld [smem:[#allocation0]]
  $region73: #{tpu_custom_call.1} parent=0
    _
  %s10 = ssub.s32 1, %s8
  %s11 = scalar_select 0, %s10, %s8
  $region1: #{tpu_custom_call.1} parent=0
    #allocation4 [shape = 'u8[16384]{0}', space=vmem, size = 0x4000, scoped, tag = 'input window, operand 0']
    #allocation5 [shape = 's32[2]{0}', space=sflag, size = 0x8, scoped, tag = 'scoped memory for tpu_custom_call.1']
    #allocation6 [shape = 's32[2]{0}', space=sflag, size = 0x8, scoped, tag = 'scoped memory for tpu_custom_call.1']
    #allocation7 [shape = 'u8[16384]{0}', space=vmem, size = 0x4000, scoped, tag = 'input window, operand 1, single buffered']
    #allocation8 [shape = 's32[1]{0}', space=sflag, size = 0x4, scoped, tag = 'scoped memory for tpu_custom_call.1']
    #allocation9 [shape = 'u8[16384]{0}', space=vmem, size = 0x4000, scoped, tag = 'input window, operand 3, single buffered']
    #allocation10 [shape = 'u8[16384]{0}', space=vmem, size = 0x4000, scoped, tag = 'output window, operand 0']
    #allocation11 [shape = 'u8[65536]{0}', space=vmem, size = 0x10000, scoped, tag = 'output window, operand 1']
    #allocation12 [shape = 's32[2]{0}', space=sflag, size = 0x8, scoped, tag = 'scoped memory for tpu_custom_call.1']
    %12 = vsyncpa [#allocation5], 0
    %s13 = scalar_lea.sflag [#allocation5], 1
    %14 = vsyncpa %s13, 0
    %15 = vsyncpa [#allocation8], 0
    %16 = vsyncpa [#allocation6], 0
    %s17 = scalar_lea.sflag [#allocation6], 1
    %18 = vsyncpa %s17, 0
    %19 = vsyncpa [#allocation12], 0
    %s20 = scalar_lea.sflag [#allocation12], 1
    %21 = vsyncpa %s20, 0
    loop: start=0, step=1, limit=4
    $region2: #{tpu_custom_call.1} parent=1 // loop_pre_header
      _
    $region3: #{tpu_custom_call.1} parent=1 // loop_header
      %s23 = sphi 0, %s27
      %p24 = scmp.ge.s32.totalorder %s23, 4
      %s33 = sphi 0, %s35
      %s36 = sphi 0, %s33
      %s37 = sphi 0, %s36
      %s53 = sphi 0, %s37
      %s57 = sphi 0, %s57
      %s59 = sphi 0, %s57
      %s60 = sphi 0, %s59
      %s74 = sphi 0, %s60
      %s78 = sphi 0, %s78
      %s80 = sphi 0, %s78
      %s81 = sphi 0, %s80
      %s95 = sphi 0, %s81
      %s99 = sphi 0, %s99
      %s101 = sphi 0, %s99
      %s102 = sphi 0, %s101
      %s116 = sphi 0, %s102
      %s120 = sphi 0, %s120
      %s122 = sphi 0, %s120
      %s123 = sphi 0, %s122
      %s137 = sphi 0, %s123
      %s143 = sphi 0, %s145
      %s146 = sphi 0, %s143
      %s147 = sphi 0, %s146
      %s163 = sphi 0, %s147
      %s169 = sphi 0, %s171
      %s172 = sphi 0, %s169
      %s173 = sphi 0, %s172
      %s189 = sphi 0, %s173
    $region4: #{tpu_custom_call.1} parent=1 // loop_header_branch
      %26 = sbr.rel (%p24) target = $region8
    $region5: #{tpu_custom_call.1} parent=1 // loop_body
      %s28 = ssub.s32 %s23, 1
      %s29 = ssub.s32 %s23, 2
      %s30 = sadd.s32 %s23, 1
      %s31 = ssub.s32 %s23, %s30
      %p32 = scmp.eq.s32.totalorder %s31, 0
      %s34 = sadd.s32 %s33, 1
      %s35 = scalar_select %p32, %s33, %s34
      %p38 = pneg %p32
      %p39 = scmp.eq.s32.totalorder %s23, 1
      %p40 = por %p38, %p39
      %p41 = scmp.ne.s32.totalorder %s33, %s36
      %p42 = scmp.eq.s32.totalorder %s23, 0
      %p43 = por %p41, %p42
      %p44 = scmp.ne.s32.totalorder %s33, %s36
      %p45 = scmp.eq.s32.totalorder %s28, 1
      %p46 = por %p44, %p45
      %p47 = scmp.ne.s32.totalorder %s36, %s37
      %p48 = scmp.eq.s32.totalorder %s28, 0
      %p49 = por %p47, %p48
      %p50 = scmp.ne.s32.totalorder %s36, %s37
      %p51 = scmp.eq.s32.totalorder %s29, 1
      %p52 = por %p50, %p51
      %p54 = scmp.ne.s32.totalorder %s37, %s53
      %p55 = scmp.eq.s32.totalorder %s29, 0
      %p56 = por %p54, %p55
      %s58 = sadd.s32 %s57, 1
      %p61 = scmp.eq.s32.totalorder %s23, 1
      %p62 = scmp.ne.s32.totalorder %s57, %s59
      %p63 = scmp.eq.s32.totalorder %s23, 0
      %p64 = por %p62, %p63
      %p65 = scmp.ne.s32.totalorder %s57, %s59
      %p66 = scmp.eq.s32.totalorder %s28, 1
      %p67 = por %p65, %p66
      %p68 = scmp.ne.s32.totalorder %s59, %s60
      %p69 = scmp.eq.s32.totalorder %s28, 0
      %p70 = por %p68, %p69
      %p71 = scmp.ne.s32.totalorder %s59, %s60
      %p72 = scmp.eq.s32.totalorder %s29, 1
      %p73 = por %p71, %p72
      %p75 = scmp.ne.s32.totalorder %s60, %s74
      %p76 = scmp.eq.s32.totalorder %s29, 0
      %p77 = por %p75, %p76
      %s79 = sadd.s32 %s78, 1
      %p82 = scmp.eq.s32.totalorder %s23, 1
      %p83 = scmp.ne.s32.totalorder %s78, %s80
      %p84 = scmp.eq.s32.totalorder %s23, 0
      %p85 = por %p83, %p84
      %p86 = scmp.ne.s32.totalorder %s78, %s80
      %p87 = scmp.eq.s32.totalorder %s28, 1
      %p88 = por %p86, %p87
      %p89 = scmp.ne.s32.totalorder %s80, %s81
      %p90 = scmp.eq.s32.totalorder %s28, 0
      %p91 = por %p89, %p90
      %p92 = scmp.ne.s32.totalorder %s80, %s81
      %p93 = scmp.eq.s32.totalorder %s29, 1
      %p94 = por %p92, %p93
      %p96 = scmp.ne.s32.totalorder %s81, %s95
      %p97 = scmp.eq.s32.totalorder %s29, 0
      %p98 = por %p96, %p97
      %s100 = sadd.s32 %s99, 1
      %p103 = scmp.eq.s32.totalorder %s23, 1
      %p104 = scmp.ne.s32.totalorder %s99, %s101
      %p105 = scmp.eq.s32.totalorder %s23, 0
      %p106 = por %p104, %p105
      %p107 = scmp.ne.s32.totalorder %s99, %s101
      %p108 = scmp.eq.s32.totalorder %s28, 1
      %p109 = por %p107, %p108
      %p110 = scmp.ne.s32.totalorder %s101, %s102
      %p111 = scmp.eq.s32.totalorder %s28, 0
      %p112 = por %p110, %p111
      %p113 = scmp.ne.s32.totalorder %s101, %s102
      %p114 = scmp.eq.s32.totalorder %s29, 1
      %p115 = por %p113, %p114
      %p117 = scmp.ne.s32.totalorder %s102, %s116
      %p118 = scmp.eq.s32.totalorder %s29, 0
      %p119 = por %p117, %p118
      %s121 = sadd.s32 %s120, 1
      %p124 = scmp.eq.s32.totalorder %s23, 1
      %p125 = scmp.ne.s32.totalorder %s120, %s122
      %p126 = scmp.eq.s32.totalorder %s23, 0
      %p127 = por %p125, %p126
      %p128 = scmp.ne.s32.totalorder %s120, %s122
      %p129 = scmp.eq.s32.totalorder %s28, 1
      %p130 = por %p128, %p129
      %p131 = scmp.ne.s32.totalorder %s122, %s123
      %p132 = scmp.eq.s32.totalorder %s28, 0
      %p133 = por %p131, %p132
      %p134 = scmp.ne.s32.totalorder %s122, %s123
      %p135 = scmp.eq.s32.totalorder %s29, 1
      %p136 = por %p134, %p135
      %p138 = scmp.ne.s32.totalorder %s123, %s137
      %p139 = scmp.eq.s32.totalorder %s29, 0
      %p140 = por %p138, %p139
      %s141 = ssub.s32 %s23, %s30
      %p142 = scmp.eq.s32.totalorder %s141, 0
      %s144 = sadd.s32 %s143, 1
      %s145 = scalar_select %p142, %s143, %s144
      %p148 = pneg %p142
      %p149 = scmp.eq.s32.totalorder %s23, 1
      %p150 = por %p148, %p149
      %p151 = scmp.ne.s32.totalorder %s143, %s146
      %p152 = scmp.eq.s32.totalorder %s23, 0
      %p153 = por %p151, %p152
      %p154 = scmp.ne.s32.totalorder %s143, %s146
      %p155 = scmp.eq.s32.totalorder %s28, 1
      %p156 = por %p154, %p155
      %p157 = scmp.ne.s32.totalorder %s146, %s147
      %p158 = scmp.eq.s32.totalorder %s28, 0
      %p159 = por %p157, %p158
      %p160 = scmp.ne.s32.totalorder %s146, %s147
      %p161 = scmp.eq.s32.totalorder %s29, 1
      %p162 = por %p160, %p161
      %p164 = scmp.ne.s32.totalorder %s147, %s163
      %p165 = scmp.eq.s32.totalorder %s29, 0
      %p166 = por %p164, %p165
      %s167 = ssub.s32 %s23, %s30
      %p168 = scmp.eq.s32.totalorder %s167, 0
      %s170 = sadd.s32 %s169, 1
      %s171 = scalar_select %p168, %s169, %s170
      %p174 = pneg %p168
      %p175 = scmp.eq.s32.totalorder %s23, 1
      %p176 = por %p174, %p175
      %p177 = scmp.ne.s32.totalorder %s169, %s172
      %p178 = scmp.eq.s32.totalorder %s23, 0
      %p179 = por %p177, %p178
      %p180 = scmp.ne.s32.totalorder %s169, %s172
      %p181 = scmp.eq.s32.totalorder %s28, 1
      %p182 = por %p180, %p181
      %p183 = scmp.ne.s32.totalorder %s172, %s173
      %p184 = scmp.eq.s32.totalorder %s28, 0
      %p185 = por %p183, %p184
      %p186 = scmp.ne.s32.totalorder %s172, %s173
      %p187 = scmp.eq.s32.totalorder %s29, 1
      %p188 = por %p186, %p187
      %p190 = scmp.ne.s32.totalorder %s173, %s189
      %p191 = scmp.eq.s32.totalorder %s29, 0
      %p192 = por %p190, %p191
      %p193 = scmp.le.s32.totalorder 1, %s23
      %p194 = scmp.lt.s32.totalorder %s23, 3
      %p195 = pnand %p193, %p194
      %p196 = pneg %p195
      // Predicated region
      $region9: #{tpu_custom_call.1} parent=5 // pred_check
        _
      $region10: #{tpu_custom_call.1} parent=5 // pred_check_branch
        %198 = sbr.rel (%p195) target = $region12
      $region11: #{tpu_custom_call.1} parent=5 // pred_region
        %s199 = ssub.s32 %s23, 1
        // Predicated region
        $region13: #{tpu_custom_call.1} parent=11 // pred_check
          %p200 = pneg %p70
        $region14: #{tpu_custom_call.1} parent=11 // pred_check_branch
          %202 = sbr.rel (%p200) target = $region16
        $region15: #{tpu_custom_call.1} parent=11 // pred_region
          %s204 = ssub.s32 512, 512
          %205 = vsyncadd [#allocation8], %s204
          %s206 = sshll.u32 [#allocation7], 4
          %s207 = int_to_ptr.vmem [resolvable:$true] %s206
          %212 = dma.hbm_to_vmem [thread:$0]  %s1, 512, %s207, [#allocation8], 128, 128, 8
        $region16: #{tpu_custom_call.1} parent=11 // pred_fallthru
          _
        // Predicated region
        $region17: #{tpu_custom_call.1} parent=11 // pred_check
          %p213 = pneg %p91
        $region18: #{tpu_custom_call.1} parent=11 // pred_check_branch
          %215 = sbr.rel (%p213) target = $region20
        $region19: #{tpu_custom_call.1} parent=11 // pred_region
          _
        $region20: #{tpu_custom_call.1} parent=11 // pred_fallthru
          _
        // Predicated region
        $region21: #{tpu_custom_call.1} parent=11 // pred_check
          %p216 = pneg %p112
        $region22: #{tpu_custom_call.1} parent=11 // pred_check_branch
          %218 = sbr.rel (%p216) target = $region24
        $region23: #{tpu_custom_call.1} parent=11 // pred_region
          %s220 = ssub.s32 512, 512
          %221 = vsyncadd [#allocation8], %s220
          %s222 = sshll.u32 [#allocation9], 4
          %s223 = int_to_ptr.vmem [resolvable:$true] %s222
          %228 = dma.hbm_to_vmem [thread:$0]  %s3, 512, %s223, [#allocation8], 128, 128, 8
        $region24: #{tpu_custom_call.1} parent=11 // pred_fallthru
          _
        // Predicated region
        $region25: #{tpu_custom_call.1} parent=11 // pred_check
          %p229 = pneg %p133
        $region26: #{tpu_custom_call.1} parent=11 // pred_check_branch
          %231 = sbr.rel (%p229) target = $region28
        $region27: #{tpu_custom_call.1} parent=11 // pred_region
          _
        $region28: #{tpu_custom_call.1} parent=11 // pred_fallthru
          _
      $region12: #{tpu_custom_call.1} parent=5 // pred_fallthru
        _
      %p232 = scmp.lt.s32.totalorder %s23, 2
      // Predicated region
      $region29: #{tpu_custom_call.1} parent=5 // pred_check
        %p233 = pneg %p232
      $region30: #{tpu_custom_call.1} parent=5 // pred_check_branch
        %235 = sbr.rel (%p233) target = $region32
      $region31: #{tpu_custom_call.1} parent=5 // pred_region
        // Predicated region
        $region33: #{tpu_custom_call.1} parent=31 // pred_check
          %p236 = pneg %p43
        $region34: #{tpu_custom_call.1} parent=31 // pred_check_branch
          %238 = sbr.rel (%p236) target = $region36
        $region35: #{tpu_custom_call.1} parent=31 // pred_region
          %s239 = sand.u32 %s33, 1
          %s240 = scalar_lea.sflag [#allocation5], %s239
          %s241 = sand.u32 %s33, 1
          %s242 = smul.addr %s241, 16
          %s243 = scalar_lea.vmem [#allocation4], %s242
          %s245 = ssub.s32 256, 256
          %246 = vsyncadd %s240, %s245
          %s247 = smul.addr %s23, 2
          %s248 = smul.addr %s247, 128
          %s249 = scalar_lea.hbm %s0, %s248
          %s250 = sshll.u32 %s243, 4
          %s251 = int_to_ptr.vmem [resolvable:$true] %s250
          %256 = dma.hbm_to_vmem [thread:$0]  %s249, 256, %s251, %s240, 128, 128, 8
        $region36: #{tpu_custom_call.1} parent=31 // pred_fallthru
          _
      $region32: #{tpu_custom_call.1} parent=5 // pred_fallthru
        _
      %p257 = scmp.le.s32.totalorder 1, %s23
      %p258 = scmp.lt.s32.totalorder %s23, 3
      %p259 = pnand %p257, %p258
      %p260 = pneg %p259
      // Predicated region
      $region37: #{tpu_custom_call.1} parent=5 // pred_check
        _
      $region38: #{tpu_custom_call.1} parent=5 // pred_check_branch
        %262 = sbr.rel (%p259) target = $region40
      $region39: #{tpu_custom_call.1} parent=5 // pred_region
        %s263 = ssub.s32 %s23, 1
        %s264 = sand.u32 %s36, 1
        %s265 = scalar_lea.sflag [#allocation5], %s264
        %s266 = sand.u32 %s36, 1
        %s267 = smul.addr %s266, 16
        %s268 = scalar_lea.vmem [#allocation4], %s267
        // Predicated region
        $region41: #{tpu_custom_call.1} parent=39 // pred_check
          %p269 = pneg %p49
        $region42: #{tpu_custom_call.1} parent=39 // pred_check_branch
          %271 = sbr.rel (%p269) target = $region44
        $region43: #{tpu_custom_call.1} parent=39 // pred_region
          %272 = dma.done %s265, 256
        $region44: #{tpu_custom_call.1} parent=39 // pred_fallthru
          _
        // Predicated region
        $region45: #{tpu_custom_call.1} parent=39 // pred_check
          %p273 = pneg %p70
        $region46: #{tpu_custom_call.1} parent=39 // pred_check_branch
          %275 = sbr.rel (%p273) target = $region48
        $region47: #{tpu_custom_call.1} parent=39 // pred_region
          %276 = dma.done [#allocation8], 512
        $region48: #{tpu_custom_call.1} parent=39 // pred_fallthru
          _
        // Predicated region
        $region49: #{tpu_custom_call.1} parent=39 // pred_check
          %p277 = pneg %p112
        $region50: #{tpu_custom_call.1} parent=39 // pred_check_branch
          %279 = sbr.rel (%p277) target = $region52
        $region51: #{tpu_custom_call.1} parent=39 // pred_region
          %280 = dma.done [#allocation8], 512
        $region52: #{tpu_custom_call.1} parent=39 // pred_fallthru
          _
        %s281 = sand.u32 %s36, 1
        %s282 = scalar_lea.sflag [#allocation5], %s281
        %s283 = sand.u32 %s36, 1
        %s284 = smul.addr %s283, 16
        %s285 = scalar_lea.vmem [#allocation4], %s284
        %p286 = pneg %p49
        %p287 = pneg %p46
        %p288 = pneg %p70
        %p289 = pneg %p67
        %p290 = pneg %p91
        %p291 = pneg %p88
        %p292 = pneg %p112
        %p293 = pneg %p109
        %p294 = pneg %p133
        %p295 = pneg %p130
        %p296 = pneg %p159
        %p297 = pneg %p156
        %s298 = sand.u32 %s146, 1
        %s299 = scalar_lea.sflag [#allocation6], %s298
        %s300 = sand.u32 %s146, 1
        %s301 = smul.addr %s300, 16
        %s302 = scalar_lea.vmem [#allocation10], %s301
        %p303 = pneg %p185
        %p304 = pneg %p182
        %s305 = sand.u32 %s172, 1
        %s306 = scalar_lea.sflag [#allocation12], %s305
        %s307 = sand.u32 %s172, 1
        %s308 = smul.addr %s307, 64
        %s309 = scalar_lea.vmem [#allocation11], %s308
        %v310 = vld [vmem:[%s268] sm:$0xff]
        %v311 = vld [vmem:[%s268 + $0x8] sm:$0xff]
        %v312 = vld [vmem:[#allocation7] sm:$0xff]
        %v313 = vld [vmem:[#allocation7 + $0x8] sm:$0xff]
        %v314 = vld [vmem:[#allocation7 + $0x10] sm:$0xff]
        %v315 = vld [vmem:[#allocation7 + $0x18] sm:$0xff]
        %v316 = vld [vmem:[%s2] sm:$0x1]
        %v318 = vlaneseq
        %v319 = vshrl.u32 %v318, 7
        %v320 = vsub.s32 0, %v319
        %v321 = vrot.slane %v316, %v320
        %vm323 = vcmask 261120
        %v325 = vsel %vm323, %v310, 0
        %v328 = vsel %vm323, %v311, 0
        %330 = vmatprep.subr.mxu0 0.0
        %331 = vmatpush1.msra.mxu0 0.0
        %332 = vmatprep.subr.mxu0 0.0
        %333 = vmatpush1.msra.mxu0 0.0
        %334 = vmatprep.subr.mxu0 0.0
        %335 = vmatpush1.msra.mxu0 0.0
        %336 = vmatprep.subr.mxu0 0.0
        %337 = vmatpush1.msra.mxu0 0.0
        %338 = vmatprep.subr.mxu0 0.0
        %339 = vmatpush1.msra.mxu0 0.0
        %340 = vmatprep.subr.mxu0 0.0
        %341 = vmatpush1.msra.mxu0 0.0
        %342 = vmatprep.subr.mxu0 0.0
        %343 = vmatpush1.msra.mxu0 0.0
        %344 = vmatprep.subr.mxu0 0.0
        %345 = vmatpush1.msra.mxu0 0.0
        %346 = vmatprep.subr.mxu0 0.0
        %347 = vmatpush1.msra.mxu0 0.0
        %348 = vmatprep.subr.mxu0 0.0
        %349 = vmatpush1.msra.mxu0 0.0
        %350 = vmatprep.subr.mxu0 0.0
        %351 = vmatpush1.msra.mxu0 0.0
        %352 = vmatprep.subr.mxu0 0.0
        %353 = vmatpush1.msra.mxu0 0.0
        %354 = vmatprep.subr.mxu0 0.0
        %355 = vmatpush1.msra.mxu0 %v315
        %356 = vmatprep.subr.mxu0 0.0
        %357 = vmatpush1.msra.mxu0 %v314
        %358 = vmatprep.subr.mxu0 0.0
        %359 = vmatpush1.msra.mxu0 %v313
        %360 = vmatprep.subr.mxu0 0.0
        %361 = vmatpush1.msra.mxu0 %v312
        %362 = vmatprep.subr.mxu0 0.0
        %363 = vmatpush2.msra.mxu0 0.0
        %364 = vmatprep.subr.mxu0 0.0
        %365 = vmatpush2.msra.mxu0 0.0
        %366 = vmatprep.subr.mxu0 0.0
        %367 = vmatpush2.msra.mxu0 0.0
        %368 = vmatprep.subr.mxu0 0.0
        %369 = vmatpush2.msra.mxu0 0.0
        %370 = vmatprep.subr.mxu0 0.0
        %371 = vmatpush2.msra.mxu0 0.0
        %372 = vmatprep.subr.mxu0 0.0
        %373 = vmatpush2.msra.mxu0 0.0
        %374 = vmatprep.subr.mxu0 0.0
        %375 = vmatpush2.msra.mxu0 0.0
        %376 = vmatprep.subr.mxu0 0.0
        %377 = vmatpush2.msra.mxu0 0.0
        %378 = vmatprep.subr.mxu0 0.0
        %379 = vmatpush2.msra.mxu0 0.0
        %380 = vmatprep.subr.mxu0 0.0
        %381 = vmatpush2.msra.mxu0 0.0
        %382 = vmatprep.subr.mxu0 0.0
        %383 = vmatpush2.msra.mxu0 0.0
        %384 = vmatprep.subr.mxu0 0.0
        %385 = vmatpush2.msra.mxu0 0.0
        %386 = vmatprep.subr.mxu0 0.0
        %387 = vmatpush2.msra.mxu0 0.0
        %388 = vmatprep.subr.mxu0 0.0
        %389 = vmatpush2.msra.mxu0 0.0
        %390 = vmatprep.subr.mxu0 0.0
        %391 = vmatpush2.msra.mxu0 0.0
        %392 = vmatprep.subr.mxu0 0.0
        %393 = vmatpush2.msra.mxu0 0.0
        %394 = vmatprep.mubr.f32.mxu0 0.0
        %395 = vmatmul.mubr.f32.gmra.mxu0 %v325
        %v396 = vpop.f32.mrf.mxu0
        %v397 = vadd.f32 %v321, %v396
        %v398 = vpop.f32.mrf.mxu0
        %399 = vmatprep.mubr.f32.mxu0 0.0
        %400 = vmatmul.mubr.f32.gmra.mxu0 %v328
        %v401 = vpop.f32.mrf.mxu0
        %v402 = vadd.f32 %v321, %v401
        %v403 = vpop.f32.mrf.mxu0
        %404 = vdwg.mxu0
        %vm405 = vcmask 785408
        %406 = vst.msk [vmem:[#allocation2] sm:$0xff] %vm405, %v397
        %407 = vst.msk [vmem:[#allocation2 + $0x8] sm:$0xff] %vm405, %v402
        %v408 = vld [vmem:[#allocation2] sm:$0xff]
        %v409 = vld [vmem:[#allocation2 + $0x8] sm:$0xff]
        %412 = vrot.lane.b32.xlu0 %v408, 96
        %v413 = vpop.permute.xlu0 %412
        %414 = vrot.lane.b32.xlu0 %v409, 96
        %v415 = vpop.permute.xlu0 %414
        %vm416 = vcmask 64512
        %v417 = vsel %vm416, %v408, 0
        %v419 = vsel %vm416, %v409, 0
        %v421 = vsel %vm416, %v413, 0
        %v423 = vsel %vm416, %v415, 0
        %425 = vmatprep.subr.mxu0 0.0
        %426 = vmatpush1.xpose.msra.mxu0 0.0
        %427 = vmatprep.subr.mxu0 0.0
        %428 = vmatpush1.xpose.msra.mxu0 0.0
        %429 = vmatprep.subr.mxu0 0.0
        %430 = vmatpush1.xpose.msra.mxu0 0.0
        %431 = vmatprep.subr.mxu0 0.0
        %432 = vmatpush1.xpose.msra.mxu0 0.0
        %433 = vmatprep.subr.mxu0 0.0
        %434 = vmatpush1.xpose.msra.mxu0 0.0
        %435 = vmatprep.subr.mxu0 0.0
        %436 = vmatpush1.xpose.msra.mxu0 0.0
        %437 = vmatprep.subr.mxu0 0.0
        %438 = vmatpush1.xpose.msra.mxu0 0.0
        %439 = vmatprep.subr.mxu0 0.0
        %440 = vmatpush1.xpose.msra.mxu0 0.0
        %441 = vmatprep.subr.mxu0 0.0
        %442 = vmatpush1.xpose.msra.mxu0 0.0
        %443 = vmatprep.subr.mxu0 0.0
        %444 = vmatpush1.xpose.msra.mxu0 0.0
        %445 = vmatprep.subr.mxu0 0.0
        %446 = vmatpush1.xpose.msra.mxu0 0.0
        %447 = vmatprep.subr.mxu0 0.0
        %448 = vmatpush1.xpose.msra.mxu0 0.0
        %449 = vmatprep.subr.mxu0 0.0
        %450 = vmatpush1.xpose.msra.mxu0 0.0
        %451 = vmatprep.subr.mxu0 0.0
        %452 = vmatpush1.xpose.msra.mxu0 0.0
        %453 = vmatprep.subr.mxu0 0.0
        %454 = vmatpush1.xpose.msra.mxu0 %v423
        %455 = vmatprep.subr.mxu0 0.0
        %456 = vmatpush1.xpose.msra.mxu0 %v421
        %457 = vmatprep.subr.mxu0 0.0
        %458 = vmatpush2.xpose.msra.mxu0 0.0
        %459 = vmatprep.subr.mxu0 0.0
        %460 = vmatpush2.xpose.msra.mxu0 0.0
        %461 = vmatprep.subr.mxu0 0.0
        %462 = vmatpush2.xpose.msra.mxu0 0.0
        %463 = vmatprep.subr.mxu0 0.0
        %464 = vmatpush2.xpose.msra.mxu0 0.0
        %465 = vmatprep.subr.mxu0 0.0
        %466 = vmatpush2.xpose.msra.mxu0 0.0
        %467 = vmatprep.subr.mxu0 0.0
        %468 = vmatpush2.xpose.msra.mxu0 0.0
        %469 = vmatprep.subr.mxu0 0.0
        %470 = vmatpush2.xpose.msra.mxu0 0.0
        %471 = vmatprep.subr.mxu0 0.0
        %472 = vmatpush2.xpose.msra.mxu0 0.0
        %473 = vmatprep.subr.mxu0 0.0
        %474 = vmatpush2.xpose.msra.mxu0 0.0
        %475 = vmatprep.subr.mxu0 0.0
        %476 = vmatpush2.xpose.msra.mxu0 0.0
        %477 = vmatprep.subr.mxu0 0.0
        %478 = vmatpush2.xpose.msra.mxu0 0.0
        %479 = vmatprep.subr.mxu0 0.0
        %480 = vmatpush2.xpose.msra.mxu0 0.0
        %481 = vmatprep.subr.mxu0 0.0
        %482 = vmatpush2.xpose.msra.mxu0 0.0
        %483 = vmatprep.subr.mxu0 0.0
        %484 = vmatpush2.xpose.msra.mxu0 0.0
        %485 = vmatprep.subr.mxu0 0.0
        %486 = vmatpush2.xpose.msra.mxu0 0.0
        %487 = vmatprep.subr.mxu0 0.0
        %488 = vmatpush2.xpose.msra.mxu0 0.0
        %489 = vmatprep.mubr.f32.mxu0 0.0
        %490 = vmatmul.mubr.f32.gmra.mxu0 %v417
        %v491 = vpop.f32.mrf.mxu0
        %v492 = vadd.f32 0.0, %v491
        %v493 = vpop.f32.mrf.mxu0
        %494 = vmatprep.mubr.f32.mxu0 0.0
        %495 = vmatmul.mubr.f32.gmra.mxu0 %v419
        %v496 = vpop.f32.mrf.mxu0
        %v497 = vadd.f32 0.0, %v496
        %v498 = vpop.f32.mrf.mxu0
        %499 = vdwg.mxu0
        %vm500 = vcmask 130048
        %v501 = vsel %vm500, %v492, -inf
        %502 = vmax.xlane.f32.xlu0 %v501
        %v503 = vpop.xlane.xlu0 %502
        %v504 = vsel %vm500, %v497, -inf
        %505 = vmax.xlane.f32.xlu0 %v504
        %v506 = vpop.xlane.xlu0 %505
        %v507 = vsub.f32 %v492, %v503
        %v508 = vsub.f32 %v497, %v506
        %v509 = vmul.f32 %v507, 1.442695
        %v510 = vpow.pop %v509
        %v511 = vmul.f32 %v508, 1.442695
        %v512 = vpow.pop %v511
        %v513 = vsel %vm500, %v510, 0.0
        %514 = vadd.xlane.f32.xlu0 %v513
        %v515 = vpop.xlane.xlu0 %514
        %v516 = vsel %vm500, %v512, 0.0
        %517 = vadd.xlane.f32.xlu0 %v516
        %v518 = vpop.xlane.xlu0 %517
        %v519 = vrcp.pop %v515
        %v520 = vmul.f32 %v510, %v519
        %v521 = vrcp.pop %v518
        %v522 = vmul.f32 %v512, %v521
        %523 = vst.msk [vmem:[%s309] sm:$0xff] %vm500, %v520
        %524 = vst.msk [vmem:[%s309 + $0x8] sm:$0xff] %vm500, %v522
        %525 = vrot.lane.b32.xlu0 %v408, 64
        %v526 = vpop.permute.xlu0 %525
        %527 = vrot.lane.b32.xlu0 %v409, 64
        %v528 = vpop.permute.xlu0 %527
        %v532 = vsel %vm500, %v520, 0
        %v535 = vsel %vm500, %v522, 0
        %537 = vmatprep.subr.mxu0 0.0
        %538 = vmatpush1.msra.mxu0 0.0
        %539 = vmatprep.subr.mxu0 0.0
        %540 = vmatpush1.msra.mxu0 0.0
        %541 = vmatprep.subr.mxu0 0.0
        %542 = vmatpush1.msra.mxu0 0.0
        %543 = vmatprep.subr.mxu0 0.0
        %544 = vmatpush1.msra.mxu0 0.0
        %545 = vmatprep.subr.mxu0 0.0
        %546 = vmatpush1.msra.mxu0 0.0
        %547 = vmatprep.subr.mxu0 0.0
        %548 = vmatpush1.msra.mxu0 0.0
        %549 = vmatprep.subr.mxu0 0.0
        %550 = vmatpush1.msra.mxu0 0.0
        %551 = vmatprep.subr.mxu0 0.0
        %552 = vmatpush1.msra.mxu0 0.0
        %553 = vmatprep.subr.mxu0 0.0
        %554 = vmatpush1.msra.mxu0 0.0
        %555 = vmatprep.subr.mxu0 0.0
        %556 = vmatpush1.msra.mxu0 0.0
        %557 = vmatprep.subr.mxu0 0.0
        %558 = vmatpush1.msra.mxu0 0.0
        %559 = vmatprep.subr.mxu0 0.0
        %560 = vmatpush1.msra.mxu0 0.0
        %561 = vmatprep.subr.mxu0 0.0
        %562 = vmatpush1.msra.mxu0 0.0
        %563 = vmatprep.subr.mxu0 0.0
        %564 = vmatpush1.msra.mxu0 0.0
        %565 = vmatprep.subr.mxu0 0.0
        %566 = vmatpush1.msra.mxu0 %v528
        %567 = vmatprep.subr.mxu0 0.0
        %568 = vmatpush1.msra.mxu0 %v526
        %569 = vmatprep.subr.mxu0 0.0
        %570 = vmatpush2.msra.mxu0 0.0
        %571 = vmatprep.subr.mxu0 0.0
        %572 = vmatpush2.msra.mxu0 0.0
        %573 = vmatprep.subr.mxu0 0.0
        %574 = vmatpush2.msra.mxu0 0.0
        %575 = vmatprep.subr.mxu0 0.0
        %576 = vmatpush2.msra.mxu0 0.0
        %577 = vmatprep.subr.mxu0 0.0
        %578 = vmatpush2.msra.mxu0 0.0
        %579 = vmatprep.subr.mxu0 0.0
        %580 = vmatpush2.msra.mxu0 0.0
        %581 = vmatprep.subr.mxu0 0.0
        %582 = vmatpush2.msra.mxu0 0.0
        %583 = vmatprep.subr.mxu0 0.0
        %584 = vmatpush2.msra.mxu0 0.0
        %585 = vmatprep.subr.mxu0 0.0
        %586 = vmatpush2.msra.mxu0 0.0
        %587 = vmatprep.subr.mxu0 0.0
        %588 = vmatpush2.msra.mxu0 0.0
        %589 = vmatprep.subr.mxu0 0.0
        %590 = vmatpush2.msra.mxu0 0.0
        %591 = vmatprep.subr.mxu0 0.0
        %592 = vmatpush2.msra.mxu0 0.0
        %593 = vmatprep.subr.mxu0 0.0
        %594 = vmatpush2.msra.mxu0 0.0
        %595 = vmatprep.subr.mxu0 0.0
        %596 = vmatpush2.msra.mxu0 0.0
        %597 = vmatprep.subr.mxu0 0.0
        %598 = vmatpush2.msra.mxu0 0.0
        %599 = vmatprep.subr.mxu0 0.0
        %600 = vmatpush2.msra.mxu0 0.0
        %601 = vmatprep.mubr.f32.mxu0 0.0
        %602 = vmatmul.mubr.f32.gmra.mxu0 %v532
        %v603 = vpop.f32.mrf.mxu0
        %v604 = vadd.f32 0.0, %v603
        %v605 = vpop.f32.mrf.mxu0
        %606 = vmatprep.mubr.f32.mxu0 0.0
        %607 = vmatmul.mubr.f32.gmra.mxu0 %v535
        %v608 = vpop.f32.mrf.mxu0
        %v609 = vadd.f32 0.0, %v608
        %v610 = vpop.f32.mrf.mxu0
        %611 = vdwg.mxu0
        %612 = vst.msk [vmem:[#allocation3] sm:$0xff] %vm416, %v604
        %613 = vst.msk [vmem:[#allocation3 + $0x8] sm:$0xff] %vm416, %v609
        %v614 = vld [vmem:[#allocation2] sm:$0xff]
        %v615 = vld [vmem:[#allocation2 + $0x8] sm:$0xff]
        %618 = vrot.lane.b32.xlu0 %v614, 120
        %v619 = vpop.permute.xlu0 %618
        %620 = vrot.lane.b32.xlu0 %v615, 120
        %v621 = vpop.permute.xlu0 %620
        %622 = vrot.lane.b32.xlu0 %v614, 88
        %v623 = vpop.permute.xlu0 %622
        %624 = vrot.lane.b32.xlu0 %v615, 88
        %v625 = vpop.permute.xlu0 %624
        %v626 = vsel %vm416, %v619, 0
        %v628 = vsel %vm416, %v621, 0
        %v630 = vsel %vm416, %v623, 0
        %v632 = vsel %vm416, %v625, 0
        %634 = vmatprep.subr.mxu0 0.0
        %635 = vmatpush1.xpose.msra.mxu0 0.0
        %636 = vmatprep.subr.mxu0 0.0
        %637 = vmatpush1.xpose.msra.mxu0 0.0
        %638 = vmatprep.subr.mxu0 0.0
        %639 = vmatpush1.xpose.msra.mxu0 0.0
        %640 = vmatprep.subr.mxu0 0.0
        %641 = vmatpush1.xpose.msra.mxu0 0.0
        %642 = vmatprep.subr.mxu0 0.0
        %643 = vmatpush1.xpose.msra.mxu0 0.0
        %644 = vmatprep.subr.mxu0 0.0
        %645 = vmatpush1.xpose.msra.mxu0 0.0
        %646 = vmatprep.subr.mxu0 0.0
        %647 = vmatpush1.xpose.msra.mxu0 0.0
        %648 = vmatprep.subr.mxu0 0.0
        %649 = vmatpush1.xpose.msra.mxu0 0.0
        %650 = vmatprep.subr.mxu0 0.0
        %651 = vmatpush1.xpose.msra.mxu0 0.0
        %652 = vmatprep.subr.mxu0 0.0
        %653 = vmatpush1.xpose.msra.mxu0 0.0
        %654 = vmatprep.subr.mxu0 0.0
        %655 = vmatpush1.xpose.msra.mxu0 0.0
        %656 = vmatprep.subr.mxu0 0.0
        %657 = vmatpush1.xpose.msra.mxu0 0.0
        %658 = vmatprep.subr.mxu0 0.0
        %659 = vmatpush1.xpose.msra.mxu0 0.0
        %660 = vmatprep.subr.mxu0 0.0
        %661 = vmatpush1.xpose.msra.mxu0 0.0
        %662 = vmatprep.subr.mxu0 0.0
        %663 = vmatpush1.xpose.msra.mxu0 %v632
        %664 = vmatprep.subr.mxu0 0.0
        %665 = vmatpush1.xpose.msra.mxu0 %v630
        %666 = vmatprep.subr.mxu0 0.0
        %667 = vmatpush2.xpose.msra.mxu0 0.0
        %668 = vmatprep.subr.mxu0 0.0
        %669 = vmatpush2.xpose.msra.mxu0 0.0
        %670 = vmatprep.subr.mxu0 0.0
        %671 = vmatpush2.xpose.msra.mxu0 0.0
        %672 = vmatprep.subr.mxu0 0.0
        %673 = vmatpush2.xpose.msra.mxu0 0.0
        %674 = vmatprep.subr.mxu0 0.0
        %675 = vmatpush2.xpose.msra.mxu0 0.0
        %676 = vmatprep.subr.mxu0 0.0
        %677 = vmatpush2.xpose.msra.mxu0 0.0
        %678 = vmatprep.subr.mxu0 0.0
        %679 = vmatpush2.xpose.msra.mxu0 0.0
        %680 = vmatprep.subr.mxu0 0.0
        %681 = vmatpush2.xpose.msra.mxu0 0.0
        %682 = vmatprep.subr.mxu0 0.0
        %683 = vmatpush2.xpose.msra.mxu0 0.0
        %684 = vmatprep.subr.mxu0 0.0
        %685 = vmatpush2.xpose.msra.mxu0 0.0
        %686 = vmatprep.subr.mxu0 0.0
        %687 = vmatpush2.xpose.msra.mxu0 0.0
        %688 = vmatprep.subr.mxu0 0.0
        %689 = vmatpush2.xpose.msra.mxu0 0.0
        %690 = vmatprep.subr.mxu0 0.0
        %691 = vmatpush2.xpose.msra.mxu0 0.0
        %692 = vmatprep.subr.mxu0 0.0
        %693 = vmatpush2.xpose.msra.mxu0 0.0
        %694 = vmatprep.subr.mxu0 0.0
        %695 = vmatpush2.xpose.msra.mxu0 0.0
        %696 = vmatprep.subr.mxu0 0.0
        %697 = vmatpush2.xpose.msra.mxu0 0.0
        %698 = vmatprep.mubr.f32.mxu0 0.0
        %699 = vmatmul.mubr.f32.gmra.mxu0 %v626
        %v700 = vpop.f32.mrf.mxu0
        %v701 = vadd.f32 0.0, %v700
        %v702 = vpop.f32.mrf.mxu0
        %703 = vmatprep.mubr.f32.mxu0 0.0
        %704 = vmatmul.mubr.f32.gmra.mxu0 %v628
        %v705 = vpop.f32.mrf.mxu0
        %v706 = vadd.f32 0.0, %v705
        %v707 = vpop.f32.mrf.mxu0
        %708 = vdwg.mxu0
        %v709 = vsel %vm500, %v701, -inf
        %710 = vmax.xlane.f32.xlu0 %v709
        %v711 = vpop.xlane.xlu0 %710
        %v712 = vsel %vm500, %v706, -inf
        %713 = vmax.xlane.f32.xlu0 %v712
        %v714 = vpop.xlane.xlu0 %713
        %v715 = vsub.f32 %v701, %v711
        %v716 = vsub.f32 %v706, %v714
        %v717 = vmul.f32 %v715, 1.442695
        %v718 = vpow.pop %v717
        %v719 = vmul.f32 %v716, 1.442695
        %v720 = vpow.pop %v719
        %v721 = vsel %vm500, %v718, 0.0
        %722 = vadd.xlane.f32.xlu0 %v721
        %v723 = vpop.xlane.xlu0 %722
        %v724 = vsel %vm500, %v720, 0.0
        %725 = vadd.xlane.f32.xlu0 %v724
        %v726 = vpop.xlane.xlu0 %725
        %v727 = vrcp.pop %v723
        %v728 = vmul.f32 %v718, %v727
        %v729 = vrcp.pop %v726
        %v730 = vmul.f32 %v720, %v729
        %s731 = scalar_lea.vmem %s309, 16 [#allocation11]
        %732 = vst.msk [vmem:[%s731] sm:$0xff] %vm500, %v728
        %733 = vst.msk [vmem:[%s731 + $0x8] sm:$0xff] %vm500, %v730
        %734 = vrot.lane.b32.xlu0 %v614, 56
        %v735 = vpop.permute.xlu0 %734
        %736 = vrot.lane.b32.xlu0 %v615, 56
        %v737 = vpop.permute.xlu0 %736
        %v741 = vsel %vm500, %v728, 0
        %v744 = vsel %vm500, %v730, 0
        %746 = vmatprep.subr.mxu0 0.0
        %747 = vmatpush1.msra.mxu0 0.0
        %748 = vmatprep.subr.mxu0 0.0
        %749 = vmatpush1.msra.mxu0 0.0
        %750 = vmatprep.subr.mxu0 0.0
        %751 = vmatpush1.msra.mxu0 0.0
        %752 = vmatprep.subr.mxu0 0.0
        %753 = vmatpush1.msra.mxu0 0.0
        %754 = vmatprep.subr.mxu0 0.0
        %755 = vmatpush1.msra.mxu0 0.0
        %756 = vmatprep.subr.mxu0 0.0
        %757 = vmatpush1.msra.mxu0 0.0
        %758 = vmatprep.subr.mxu0 0.0
        %759 = vmatpush1.msra.mxu0 0.0
        %760 = vmatprep.subr.mxu0 0.0
        %761 = vmatpush1.msra.mxu0 0.0
        %762 = vmatprep.subr.mxu0 0.0
        %763 = vmatpush1.msra.mxu0 0.0
        %764 = vmatprep.subr.mxu0 0.0
        %765 = vmatpush1.msra.mxu0 0.0
        %766 = vmatprep.subr.mxu0 0.0
        %767 = vmatpush1.msra.mxu0 0.0
        %768 = vmatprep.subr.mxu0 0.0
        %769 = vmatpush1.msra.mxu0 0.0
        %770 = vmatprep.subr.mxu0 0.0
        %771 = vmatpush1.msra.mxu0 0.0
        %772 = vmatprep.subr.mxu0 0.0
        %773 = vmatpush1.msra.mxu0 0.0
        %774 = vmatprep.subr.mxu0 0.0
        %775 = vmatpush1.msra.mxu0 %v737
        %776 = vmatprep.subr.mxu0 0.0
        %777 = vmatpush1.msra.mxu0 %v735
        %778 = vmatprep.subr.mxu0 0.0
        %779 = vmatpush2.msra.mxu0 0.0
        %780 = vmatprep.subr.mxu0 0.0
        %781 = vmatpush2.msra.mxu0 0.0
        %782 = vmatprep.subr.mxu0 0.0
        %783 = vmatpush2.msra.mxu0 0.0
        %784 = vmatprep.subr.mxu0 0.0
        %785 = vmatpush2.msra.mxu0 0.0
        %786 = vmatprep.subr.mxu0 0.0
        %787 = vmatpush2.msra.mxu0 0.0
        %788 = vmatprep.subr.mxu0 0.0
        %789 = vmatpush2.msra.mxu0 0.0
        %790 = vmatprep.subr.mxu0 0.0
        %791 = vmatpush2.msra.mxu0 0.0
        %792 = vmatprep.subr.mxu0 0.0
        %793 = vmatpush2.msra.mxu0 0.0
        %794 = vmatprep.subr.mxu0 0.0
        %795 = vmatpush2.msra.mxu0 0.0
        %796 = vmatprep.subr.mxu0 0.0
        %797 = vmatpush2.msra.mxu0 0.0
        %798 = vmatprep.subr.mxu0 0.0
        %799 = vmatpush2.msra.mxu0 0.0
        %800 = vmatprep.subr.mxu0 0.0
        %801 = vmatpush2.msra.mxu0 0.0
        %802 = vmatprep.subr.mxu0 0.0
        %803 = vmatpush2.msra.mxu0 0.0
        %804 = vmatprep.subr.mxu0 0.0
        %805 = vmatpush2.msra.mxu0 0.0
        %806 = vmatprep.subr.mxu0 0.0
        %807 = vmatpush2.msra.mxu0 0.0
        %808 = vmatprep.subr.mxu0 0.0
        %809 = vmatpush2.msra.mxu0 0.0
        %810 = vmatprep.mubr.f32.mxu0 0.0
        %811 = vmatmul.mubr.f32.gmra.mxu0 %v741
        %v812 = vpop.f32.mrf.mxu0
        %v813 = vadd.f32 0.0, %v812
        %v814 = vpop.f32.mrf.mxu0
        %815 = vmatprep.mubr.f32.mxu0 0.0
        %816 = vmatmul.mubr.f32.gmra.mxu0 %v744
        %v817 = vpop.f32.mrf.mxu0
        %v818 = vadd.f32 0.0, %v817
        %v819 = vpop.f32.mrf.mxu0
        %820 = vdwg.mxu0
        %823 = vrot.lane.b32.xlu0 %v813, 8
        %v824 = vpop.permute.xlu0 %823
        %825 = vrot.lane.b32.xlu0 %v818, 8
        %v826 = vpop.permute.xlu0 %825
        %vm829 = vcmask 130112
        %830 = vst.msk [vmem:[#allocation3] sm:$0xff] %vm829, %v824
        %831 = vst.msk [vmem:[#allocation3 + $0x8] sm:$0xff] %vm829, %v826
        %v832 = vld [vmem:[#allocation2] sm:$0xff]
        %v833 = vld [vmem:[#allocation2 + $0x8] sm:$0xff]
        %836 = vrot.lane.b32.xlu0 %v832, 112
        %v837 = vpop.permute.xlu0 %836
        %838 = vrot.lane.b32.xlu0 %v833, 112
        %v839 = vpop.permute.xlu0 %838
        %840 = vrot.lane.b32.xlu0 %v832, 80
        %v841 = vpop.permute.xlu0 %840
        %842 = vrot.lane.b32.xlu0 %v833, 80
        %v843 = vpop.permute.xlu0 %842
        %v844 = vsel %vm416, %v837, 0
        %v846 = vsel %vm416, %v839, 0
        %v848 = vsel %vm416, %v841, 0
        %v850 = vsel %vm416, %v843, 0
        %852 = vmatprep.subr.mxu0 0.0
        %853 = vmatpush1.xpose.msra.mxu0 0.0
        %854 = vmatprep.subr.mxu0 0.0
        %855 = vmatpush1.xpose.msra.mxu0 0.0
        %856 = vmatprep.subr.mxu0 0.0
        %857 = vmatpush1.xpose.msra.mxu0 0.0
        %858 = vmatprep.subr.mxu0 0.0
        %859 = vmatpush1.xpose.msra.mxu0 0.0
        %860 = vmatprep.subr.mxu0 0.0
        %861 = vmatpush1.xpose.msra.mxu0 0.0
        %862 = vmatprep.subr.mxu0 0.0
        %863 = vmatpush1.xpose.msra.mxu0 0.0
        %864 = vmatprep.subr.mxu0 0.0
        %865 = vmatpush1.xpose.msra.mxu0 0.0
        %866 = vmatprep.subr.mxu0 0.0
        %867 = vmatpush1.xpose.msra.mxu0 0.0
        %868 = vmatprep.subr.mxu0 0.0
        %869 = vmatpush1.xpose.msra.mxu0 0.0
        %870 = vmatprep.subr.mxu0 0.0
        %871 = vmatpush1.xpose.msra.mxu0 0.0
        %872 = vmatprep.subr.mxu0 0.0
        %873 = vmatpush1.xpose.msra.mxu0 0.0
        %874 = vmatprep.subr.mxu0 0.0
        %875 = vmatpush1.xpose.msra.mxu0 0.0
        %876 = vmatprep.subr.mxu0 0.0
        %877 = vmatpush1.xpose.msra.mxu0 0.0
        %878 = vmatprep.subr.mxu0 0.0
        %879 = vmatpush1.xpose.msra.mxu0 0.0
        %880 = vmatprep.subr.mxu0 0.0
        %881 = vmatpush1.xpose.msra.mxu0 %v850
        %882 = vmatprep.subr.mxu0 0.0
        %883 = vmatpush1.xpose.msra.mxu0 %v848
        %884 = vmatprep.subr.mxu0 0.0
        %885 = vmatpush2.xpose.msra.mxu0 0.0
        %886 = vmatprep.subr.mxu0 0.0
        %887 = vmatpush2.xpose.msra.mxu0 0.0
        %888 = vmatprep.subr.mxu0 0.0
        %889 = vmatpush2.xpose.msra.mxu0 0.0
        %890 = vmatprep.subr.mxu0 0.0
        %891 = vmatpush2.xpose.msra.mxu0 0.0
        %892 = vmatprep.subr.mxu0 0.0
        %893 = vmatpush2.xpose.msra.mxu0 0.0
        %894 = vmatprep.subr.mxu0 0.0
        %895 = vmatpush2.xpose.msra.mxu0 0.0
        %896 = vmatprep.subr.mxu0 0.0
        %897 = vmatpush2.xpose.msra.mxu0 0.0
        %898 = vmatprep.subr.mxu0 0.0
        %899 = vmatpush2.xpose.msra.mxu0 0.0
        %900 = vmatprep.subr.mxu0 0.0
        %901 = vmatpush2.xpose.msra.mxu0 0.0
        %902 = vmatprep.subr.mxu0 0.0
        %903 = vmatpush2.xpose.msra.mxu0 0.0
        %904 = vmatprep.subr.mxu0 0.0
        %905 = vmatpush2.xpose.msra.mxu0 0.0
        %906 = vmatprep.subr.mxu0 0.0
        %907 = vmatpush2.xpose.msra.mxu0 0.0
        %908 = vmatprep.subr.mxu0 0.0
        %909 = vmatpush2.xpose.msra.mxu0 0.0
        %910 = vmatprep.subr.mxu0 0.0
        %911 = vmatpush2.xpose.msra.mxu0 0.0
        %912 = vmatprep.subr.mxu0 0.0
        %913 = vmatpush2.xpose.msra.mxu0 0.0
        %914 = vmatprep.subr.mxu0 0.0
        %915 = vmatpush2.xpose.msra.mxu0 0.0
        %916 = vmatprep.mubr.f32.mxu0 0.0
        %917 = vmatmul.mubr.f32.gmra.mxu0 %v844
        %v918 = vpop.f32.mrf.mxu0
        %v919 = vadd.f32 0.0, %v918
        %v920 = vpop.f32.mrf.mxu0
        %921 = vmatprep.mubr.f32.mxu0 0.0
        %922 = vmatmul.mubr.f32.gmra.mxu0 %v846
        %v923 = vpop.f32.mrf.mxu0
        %v924 = vadd.f32 0.0, %v923
        %v925 = vpop.f32.mrf.mxu0
        %926 = vdwg.mxu0
        %v927 = vsel %vm500, %v919, -inf
        %928 = vmax.xlane.f32.xlu0 %v927
        %v929 = vpop.xlane.xlu0 %928
        %v930 = vsel %vm500, %v924, -inf
        %931 = vmax.xlane.f32.xlu0 %v930
        %v932 = vpop.xlane.xlu0 %931
        %v933 = vsub.f32 %v919, %v929
        %v934 = vsub.f32 %v924, %v932
        %v935 = vmul.f32 %v933, 1.442695
        %v936 = vpow.pop %v935
        %v937 = vmul.f32 %v934, 1.442695
        %v938 = vpow.pop %v937
        %v939 = vsel %vm500, %v936, 0.0
        %940 = vadd.xlane.f32.xlu0 %v939
        %v941 = vpop.xlane.xlu0 %940
        %v942 = vsel %vm500, %v938, 0.0
        %943 = vadd.xlane.f32.xlu0 %v942
        %v944 = vpop.xlane.xlu0 %943
        %v945 = vrcp.pop %v941
        %v946 = vmul.f32 %v936, %v945
        %v947 = vrcp.pop %v944
        %v948 = vmul.f32 %v938, %v947
        %s949 = scalar_lea.vmem %s309, 32 [#allocation11]
        %950 = vst.msk [vmem:[%s949] sm:$0xff] %vm500, %v946
        %951 = vst.msk [vmem:[%s949 + $0x8] sm:$0xff] %vm500, %v948
        %952 = vrot.lane.b32.xlu0 %v832, 48
        %v953 = vpop.permute.xlu0 %952
        %954 = vrot.lane.b32.xlu0 %v833, 48
        %v955 = vpop.permute.xlu0 %954
        %v959 = vsel %vm500, %v946, 0
        %v962 = vsel %vm500, %v948, 0
        %964 = vmatprep.subr.mxu0 0.0
        %965 = vmatpush1.msra.mxu0 0.0
        %966 = vmatprep.subr.mxu0 0.0
        %967 = vmatpush1.msra.mxu0 0.0
        %968 = vmatprep.subr.mxu0 0.0
        %969 = vmatpush1.msra.mxu0 0.0
        %970 = vmatprep.subr.mxu0 0.0
        %971 = vmatpush1.msra.mxu0 0.0
        %972 = vmatprep.subr.mxu0 0.0
        %973 = vmatpush1.msra.mxu0 0.0
        %974 = vmatprep.subr.mxu0 0.0
        %975 = vmatpush1.msra.mxu0 0.0
        %976 = vmatprep.subr.mxu0 0.0
        %977 = vmatpush1.msra.mxu0 0.0
        %978 = vmatprep.subr.mxu0 0.0
        %979 = vmatpush1.msra.mxu0 0.0
        %980 = vmatprep.subr.mxu0 0.0
        %981 = vmatpush1.msra.mxu0 0.0
        %982 = vmatprep.subr.mxu0 0.0
        %983 = vmatpush1.msra.mxu0 0.0
        %984 = vmatprep.subr.mxu0 0.0
        %985 = vmatpush1.msra.mxu0 0.0
        %986 = vmatprep.subr.mxu0 0.0
        %987 = vmatpush1.msra.mxu0 0.0
        %988 = vmatprep.subr.mxu0 0.0
        %989 = vmatpush1.msra.mxu0 0.0
        %990 = vmatprep.subr.mxu0 0.0
        %991 = vmatpush1.msra.mxu0 0.0
        %992 = vmatprep.subr.mxu0 0.0
        %993 = vmatpush1.msra.mxu0 %v955
        %994 = vmatprep.subr.mxu0 0.0
        %995 = vmatpush1.msra.mxu0 %v953
        %996 = vmatprep.subr.mxu0 0.0
        %997 = vmatpush2.msra.mxu0 0.0
        %998 = vmatprep.subr.mxu0 0.0
        %999 = vmatpush2.msra.mxu0 0.0
        %1000 = vmatprep.subr.mxu0 0.0
        %1001 = vmatpush2.msra.mxu0 0.0
        %1002 = vmatprep.subr.mxu0 0.0
        %1003 = vmatpush2.msra.mxu0 0.0
        %1004 = vmatprep.subr.mxu0 0.0
        %1005 = vmatpush2.msra.mxu0 0.0
        %1006 = vmatprep.subr.mxu0 0.0
        %1007 = vmatpush2.msra.mxu0 0.0
        %1008 = vmatprep.subr.mxu0 0.0
        %1009 = vmatpush2.msra.mxu0 0.0
        %1010 = vmatprep.subr.mxu0 0.0
        %1011 = vmatpush2.msra.mxu0 0.0
        %1012 = vmatprep.subr.mxu0 0.0
        %1013 = vmatpush2.msra.mxu0 0.0
        %1014 = vmatprep.subr.mxu0 0.0
        %1015 = vmatpush2.msra.mxu0 0.0
        %1016 = vmatprep.subr.mxu0 0.0
        %1017 = vmatpush2.msra.mxu0 0.0
        %1018 = vmatprep.subr.mxu0 0.0
        %1019 = vmatpush2.msra.mxu0 0.0
        %1020 = vmatprep.subr.mxu0 0.0
        %1021 = vmatpush2.msra.mxu0 0.0
        %1022 = vmatprep.subr.mxu0 0.0
        %1023 = vmatpush2.msra.mxu0 0.0
        %1024 = vmatprep.subr.mxu0 0.0
        %1025 = vmatpush2.msra.mxu0 0.0
        %1026 = vmatprep.subr.mxu0 0.0
        %1027 = vmatpush2.msra.mxu0 0.0
        %1028 = vmatprep.mubr.f32.mxu0 0.0
        %1029 = vmatmul.mubr.f32.gmra.mxu0 %v959
        %v1030 = vpop.f32.mrf.mxu0
        %v1031 = vadd.f32 0.0, %v1030
        %v1032 = vpop.f32.mrf.mxu0
        %1033 = vmatprep.mubr.f32.mxu0 0.0
        %1034 = vmatmul.mubr.f32.gmra.mxu0 %v962
        %v1035 = vpop.f32.mrf.mxu0
        %v1036 = vadd.f32 0.0, %v1035
        %v1037 = vpop.f32.mrf.mxu0
        %1038 = vdwg.mxu0
        %1041 = vrot.lane.b32.xlu0 %v1031, 16
        %v1042 = vpop.permute.xlu0 %1041
        %1043 = vrot.lane.b32.xlu0 %v1036, 16
        %v1044 = vpop.permute.xlu0 %1043
        %vm1047 = vcmask 195712
        %1048 = vst.msk [vmem:[#allocation3] sm:$0xff] %vm1047, %v1042
        %1049 = vst.msk [vmem:[#allocation3 + $0x8] sm:$0xff] %vm1047, %v1044
        %v1050 = vld [vmem:[#allocation2] sm:$0xff]
        %v1051 = vld [vmem:[#allocation2 + $0x8] sm:$0xff]
        %1054 = vrot.lane.b32.xlu0 %v1050, 104
        %v1055 = vpop.permute.xlu0 %1054
        %1056 = vrot.lane.b32.xlu0 %v1051, 104
        %v1057 = vpop.permute.xlu0 %1056
        %1058 = vrot.lane.b32.xlu0 %v1050, 72
        %v1059 = vpop.permute.xlu0 %1058
        %1060 = vrot.lane.b32.xlu0 %v1051, 72
        %v1061 = vpop.permute.xlu0 %1060
        %v1062 = vsel %vm416, %v1055, 0
        %v1064 = vsel %vm416, %v1057, 0
        %v1066 = vsel %vm416, %v1059, 0
        %v1068 = vsel %vm416, %v1061, 0
        %1070 = vmatprep.subr.mxu0 0.0
        %1071 = vmatpush1.xpose.msra.mxu0 0.0
        %1072 = vmatprep.subr.mxu0 0.0
        %1073 = vmatpush1.xpose.msra.mxu0 0.0
        %1074 = vmatprep.subr.mxu0 0.0
        %1075 = vmatpush1.xpose.msra.mxu0 0.0
        %1076 = vmatprep.subr.mxu0 0.0
        %1077 = vmatpush1.xpose.msra.mxu0 0.0
        %1078 = vmatprep.subr.mxu0 0.0
        %1079 = vmatpush1.xpose.msra.mxu0 0.0
        %1080 = vmatprep.subr.mxu0 0.0
        %1081 = vmatpush1.xpose.msra.mxu0 0.0
        %1082 = vmatprep.subr.mxu0 0.0
        %1083 = vmatpush1.xpose.msra.mxu0 0.0
        %1084 = vmatprep.subr.mxu0 0.0
        %1085 = vmatpush1.xpose.msra.mxu0 0.0
        %1086 = vmatprep.subr.mxu0 0.0
        %1087 = vmatpush1.xpose.msra.mxu0 0.0
        %1088 = vmatprep.subr.mxu0 0.0
        %1089 = vmatpush1.xpose.msra.mxu0 0.0
        %1090 = vmatprep.subr.mxu0 0.0
        %1091 = vmatpush1.xpose.msra.mxu0 0.0
        %1092 = vmatprep.subr.mxu0 0.0
        %1093 = vmatpush1.xpose.msra.mxu0 0.0
        %1094 = vmatprep.subr.mxu0 0.0
        %1095 = vmatpush1.xpose.msra.mxu0 0.0
        %1096 = vmatprep.subr.mxu0 0.0
        %1097 = vmatpush1.xpose.msra.mxu0 0.0
        %1098 = vmatprep.subr.mxu0 0.0
        %1099 = vmatpush1.xpose.msra.mxu0 %v1068
        %1100 = vmatprep.subr.mxu0 0.0
        %1101 = vmatpush1.xpose.msra.mxu0 %v1066
        %1102 = vmatprep.subr.mxu0 0.0
        %1103 = vmatpush2.xpose.msra.mxu0 0.0
        %1104 = vmatprep.subr.mxu0 0.0
        %1105 = vmatpush2.xpose.msra.mxu0 0.0
        %1106 = vmatprep.subr.mxu0 0.0
        %1107 = vmatpush2.xpose.msra.mxu0 0.0
        %1108 = vmatprep.subr.mxu0 0.0
        %1109 = vmatpush2.xpose.msra.mxu0 0.0
        %1110 = vmatprep.subr.mxu0 0.0
        %1111 = vmatpush2.xpose.msra.mxu0 0.0
        %1112 = vmatprep.subr.mxu0 0.0
        %1113 = vmatpush2.xpose.msra.mxu0 0.0
        %1114 = vmatprep.subr.mxu0 0.0
        %1115 = vmatpush2.xpose.msra.mxu0 0.0
        %1116 = vmatprep.subr.mxu0 0.0
        %1117 = vmatpush2.xpose.msra.mxu0 0.0
        %1118 = vmatprep.subr.mxu0 0.0
        %1119 = vmatpush2.xpose.msra.mxu0 0.0
        %1120 = vmatprep.subr.mxu0 0.0
        %1121 = vmatpush2.xpose.msra.mxu0 0.0
        %1122 = vmatprep.subr.mxu0 0.0
        %1123 = vmatpush2.xpose.msra.mxu0 0.0
        %1124 = vmatprep.subr.mxu0 0.0
        %1125 = vmatpush2.xpose.msra.mxu0 0.0
        %1126 = vmatprep.subr.mxu0 0.0
        %1127 = vmatpush2.xpose.msra.mxu0 0.0
        %1128 = vmatprep.subr.mxu0 0.0
        %1129 = vmatpush2.xpose.msra.mxu0 0.0
        %1130 = vmatprep.subr.mxu0 0.0
        %1131 = vmatpush2.xpose.msra.mxu0 0.0
        %1132 = vmatprep.subr.mxu0 0.0
        %1133 = vmatpush2.xpose.msra.mxu0 0.0
        %1134 = vmatprep.mubr.f32.mxu0 0.0
        %1135 = vmatmul.mubr.f32.gmra.mxu0 %v1062
        %v1136 = vpop.f32.mrf.mxu0
        %v1137 = vadd.f32 0.0, %v1136
        %v1138 = vpop.f32.mrf.mxu0
        %1139 = vmatprep.mubr.f32.mxu0 0.0
        %1140 = vmatmul.mubr.f32.gmra.mxu0 %v1064
        %v1141 = vpop.f32.mrf.mxu0
        %v1142 = vadd.f32 0.0, %v1141
        %v1143 = vpop.f32.mrf.mxu0
        %1144 = vdwg.mxu0
        %v1145 = vsel %vm500, %v1137, -inf
        %1146 = vmax.xlane.f32.xlu0 %v1145
        %v1147 = vpop.xlane.xlu0 %1146
        %v1148 = vsel %vm500, %v1142, -inf
        %1149 = vmax.xlane.f32.xlu0 %v1148
        %v1150 = vpop.xlane.xlu0 %1149
        %v1151 = vsub.f32 %v1137, %v1147
        %v1152 = vsub.f32 %v1142, %v1150
        %v1153 = vmul.f32 %v1151, 1.442695
        %v1154 = vpow.pop %v1153
        %v1155 = vmul.f32 %v1152, 1.442695
        %v1156 = vpow.pop %v1155
        %v1157 = vsel %vm500, %v1154, 0.0
        %1158 = vadd.xlane.f32.xlu0 %v1157
        %v1159 = vpop.xlane.xlu0 %1158
        %v1160 = vsel %vm500, %v1156, 0.0
        %1161 = vadd.xlane.f32.xlu0 %v1160
        %v1162 = vpop.xlane.xlu0 %1161
        %v1163 = vrcp.pop %v1159
        %v1164 = vmul.f32 %v1154, %v1163
        %v1165 = vrcp.pop %v1162
        %v1166 = vmul.f32 %v1156, %v1165
        %s1167 = scalar_lea.vmem %s309, 48 [#allocation11]
        %1168 = vst.msk [vmem:[%s1167] sm:$0xff] %vm500, %v1164
        %1169 = vst.msk [vmem:[%s1167 + $0x8] sm:$0xff] %vm500, %v1166
        %1170 = vrot.lane.b32.xlu0 %v1050, 40
        %v1171 = vpop.permute.xlu0 %1170
        %1172 = vrot.lane.b32.xlu0 %v1051, 40
        %v1173 = vpop.permute.xlu0 %1172
        %v1177 = vsel %vm500, %v1164, 0
        %v1180 = vsel %vm500, %v1166, 0
        %1182 = vmatprep.subr.mxu0 0.0
        %1183 = vmatpush1.msra.mxu0 0.0
        %1184 = vmatprep.subr.mxu0 0.0
        %1185 = vmatpush1.msra.mxu0 0.0
        %1186 = vmatprep.subr.mxu0 0.0
        %1187 = vmatpush1.msra.mxu0 0.0
        %1188 = vmatprep.subr.mxu0 0.0
        %1189 = vmatpush1.msra.mxu0 0.0
        %1190 = vmatprep.subr.mxu0 0.0
        %1191 = vmatpush1.msra.mxu0 0.0
        %1192 = vmatprep.subr.mxu0 0.0
        %1193 = vmatpush1.msra.mxu0 0.0
        %1194 = vmatprep.subr.mxu0 0.0
        %1195 = vmatpush1.msra.mxu0 0.0
        %1196 = vmatprep.subr.mxu0 0.0
        %1197 = vmatpush1.msra.mxu0 0.0
        %1198 = vmatprep.subr.mxu0 0.0
        %1199 = vmatpush1.msra.mxu0 0.0
        %1200 = vmatprep.subr.mxu0 0.0
        %1201 = vmatpush1.msra.mxu0 0.0
        %1202 = vmatprep.subr.mxu0 0.0
        %1203 = vmatpush1.msra.mxu0 0.0
        %1204 = vmatprep.subr.mxu0 0.0
        %1205 = vmatpush1.msra.mxu0 0.0
        %1206 = vmatprep.subr.mxu0 0.0
        %1207 = vmatpush1.msra.mxu0 0.0
        %1208 = vmatprep.subr.mxu0 0.0
        %1209 = vmatpush1.msra.mxu0 0.0
        %1210 = vmatprep.subr.mxu0 0.0
        %1211 = vmatpush1.msra.mxu0 %v1173
        %1212 = vmatprep.subr.mxu0 0.0
        %1213 = vmatpush1.msra.mxu0 %v1171
        %1214 = vmatprep.subr.mxu0 0.0
        %1215 = vmatpush2.msra.mxu0 0.0
        %1216 = vmatprep.subr.mxu0 0.0
        %1217 = vmatpush2.msra.mxu0 0.0
        %1218 = vmatprep.subr.mxu0 0.0
        %1219 = vmatpush2.msra.mxu0 0.0
        %1220 = vmatprep.subr.mxu0 0.0
        %1221 = vmatpush2.msra.mxu0 0.0
        %1222 = vmatprep.subr.mxu0 0.0
        %1223 = vmatpush2.msra.mxu0 0.0
        %1224 = vmatprep.subr.mxu0 0.0
        %1225 = vmatpush2.msra.mxu0 0.0
        %1226 = vmatprep.subr.mxu0 0.0
        %1227 = vmatpush2.msra.mxu0 0.0
        %1228 = vmatprep.subr.mxu0 0.0
        %1229 = vmatpush2.msra.mxu0 0.0
        %1230 = vmatprep.subr.mxu0 0.0
        %1231 = vmatpush2.msra.mxu0 0.0
        %1232 = vmatprep.subr.mxu0 0.0
        %1233 = vmatpush2.msra.mxu0 0.0
        %1234 = vmatprep.subr.mxu0 0.0
        %1235 = vmatpush2.msra.mxu0 0.0
        %1236 = vmatprep.subr.mxu0 0.0
        %1237 = vmatpush2.msra.mxu0 0.0
        %1238 = vmatprep.subr.mxu0 0.0
        %1239 = vmatpush2.msra.mxu0 0.0
        %1240 = vmatprep.subr.mxu0 0.0
        %1241 = vmatpush2.msra.mxu0 0.0
        %1242 = vmatprep.subr.mxu0 0.0
        %1243 = vmatpush2.msra.mxu0 0.0
        %1244 = vmatprep.subr.mxu0 0.0
        %1245 = vmatpush2.msra.mxu0 0.0
        %1246 = vmatprep.mubr.f32.mxu0 0.0
        %1247 = vmatmul.mubr.f32.gmra.mxu0 %v1177
        %v1248 = vpop.f32.mrf.mxu0
        %v1249 = vadd.f32 0.0, %v1248
        %v1250 = vpop.f32.mrf.mxu0
        %1251 = vmatprep.mubr.f32.mxu0 0.0
        %1252 = vmatmul.mubr.f32.gmra.mxu0 %v1180
        %v1253 = vpop.f32.mrf.mxu0
        %v1254 = vadd.f32 0.0, %v1253
        %v1255 = vpop.f32.mrf.mxu0
        %1256 = vdwg.mxu0
        %1259 = vrot.lane.b32.xlu0 %v1249, 24
        %v1260 = vpop.permute.xlu0 %1259
        %1261 = vrot.lane.b32.xlu0 %v1254, 24
        %v1262 = vpop.permute.xlu0 %1261
        %vm1265 = vcmask 261312
        %1266 = vst.msk [vmem:[#allocation3] sm:$0xff] %vm1265, %v1260
        %1267 = vst.msk [vmem:[#allocation3 + $0x8] sm:$0xff] %vm1265, %v1262
        %v1268 = vld [vmem:[#allocation3] sm:$0xff]
        %v1269 = vld [vmem:[#allocation3 + $0x8] sm:$0xff]
        %v1270 = vld [vmem:[#allocation9] sm:$0xff]
        %v1271 = vld [vmem:[#allocation9 + $0x8] sm:$0xff]
        %v1272 = vld [vmem:[#allocation9 + $0x10] sm:$0xff]
        %v1273 = vld [vmem:[#allocation9 + $0x18] sm:$0xff]
        %v1274 = vld [vmem:[%s4] sm:$0x1]
        %v1276 = vlaneseq
        %v1277 = vshrl.u32 %v1276, 7
        %v1278 = vsub.s32 0, %v1277
        %v1279 = vrot.slane %v1274, %v1278
        %v1282 = vsel %vm323, %v1268, 0
        %v1285 = vsel %vm323, %v1269, 0
        %1287 = vmatprep.subr.mxu0 0.0
        %1288 = vmatpush1.msra.mxu0 0.0
        %1289 = vmatprep.subr.mxu0 0.0
        %1290 = vmatpush1.msra.mxu0 0.0
        %1291 = vmatprep.subr.mxu0 0.0
        %1292 = vmatpush1.msra.mxu0 0.0
        %1293 = vmatprep.subr.mxu0 0.0
        %1294 = vmatpush1.msra.mxu0 0.0
        %1295 = vmatprep.subr.mxu0 0.0
        %1296 = vmatpush1.msra.mxu0 0.0
        %1297 = vmatprep.subr.mxu0 0.0
        %1298 = vmatpush1.msra.mxu0 0.0
        %1299 = vmatprep.subr.mxu0 0.0
        %1300 = vmatpush1.msra.mxu0 0.0
        %1301 = vmatprep.subr.mxu0 0.0
        %1302 = vmatpush1.msra.mxu0 0.0
        %1303 = vmatprep.subr.mxu0 0.0
        %1304 = vmatpush1.msra.mxu0 0.0
        %1305 = vmatprep.subr.mxu0 0.0
        %1306 = vmatpush1.msra.mxu0 0.0
        %1307 = vmatprep.subr.mxu0 0.0
        %1308 = vmatpush1.msra.mxu0 0.0
        %1309 = vmatprep.subr.mxu0 0.0
        %1310 = vmatpush1.msra.mxu0 0.0
        %1311 = vmatprep.subr.mxu0 0.0
        %1312 = vmatpush1.msra.mxu0 %v1273
        %1313 = vmatprep.subr.mxu0 0.0
        %1314 = vmatpush1.msra.mxu0 %v1272
        %1315 = vmatprep.subr.mxu0 0.0
        %1316 = vmatpush1.msra.mxu0 %v1271
        %1317 = vmatprep.subr.mxu0 0.0
        %1318 = vmatpush1.msra.mxu0 %v1270
        %1319 = vmatprep.subr.mxu0 0.0
        %1320 = vmatpush2.msra.mxu0 0.0
        %1321 = vmatprep.subr.mxu0 0.0
        %1322 = vmatpush2.msra.mxu0 0.0
        %1323 = vmatprep.subr.mxu0 0.0
        %1324 = vmatpush2.msra.mxu0 0.0
        %1325 = vmatprep.subr.mxu0 0.0
        %1326 = vmatpush2.msra.mxu0 0.0
        %1327 = vmatprep.subr.mxu0 0.0
        %1328 = vmatpush2.msra.mxu0 0.0
        %1329 = vmatprep.subr.mxu0 0.0
        %1330 = vmatpush2.msra.mxu0 0.0
        %1331 = vmatprep.subr.mxu0 0.0
        %1332 = vmatpush2.msra.mxu0 0.0
        %1333 = vmatprep.subr.mxu0 0.0
        %1334 = vmatpush2.msra.mxu0 0.0
        %1335 = vmatprep.subr.mxu0 0.0
        %1336 = vmatpush2.msra.mxu0 0.0
        %1337 = vmatprep.subr.mxu0 0.0
        %1338 = vmatpush2.msra.mxu0 0.0
        %1339 = vmatprep.subr.mxu0 0.0
        %1340 = vmatpush2.msra.mxu0 0.0
        %1341 = vmatprep.subr.mxu0 0.0
        %1342 = vmatpush2.msra.mxu0 0.0
        %1343 = vmatprep.subr.mxu0 0.0
        %1344 = vmatpush2.msra.mxu0 0.0
        %1345 = vmatprep.subr.mxu0 0.0
        %1346 = vmatpush2.msra.mxu0 0.0
        %1347 = vmatprep.subr.mxu0 0.0
        %1348 = vmatpush2.msra.mxu0 0.0
        %1349 = vmatprep.subr.mxu0 0.0
        %1350 = vmatpush2.msra.mxu0 0.0
        %1351 = vmatprep.mubr.f32.mxu0 0.0
        %1352 = vmatmul.mubr.f32.gmra.mxu0 %v1282
        %v1353 = vpop.f32.mrf.mxu0
        %v1354 = vadd.f32 %v1279, %v1353
        %v1355 = vpop.f32.mrf.mxu0
        %1356 = vmatprep.mubr.f32.mxu0 0.0
        %1357 = vmatmul.mubr.f32.gmra.mxu0 %v1285
        %v1358 = vpop.f32.mrf.mxu0
        %v1359 = vadd.f32 %v1279, %v1358
        %v1360 = vpop.f32.mrf.mxu0
        %1361 = vdwg.mxu0
        %1362 = vst.msk [vmem:[%s302] sm:$0xff] %vm323, %v1354
        %1363 = vst.msk [vmem:[%s302 + $0x8] sm:$0xff] %vm323, %v1359
        %s1364 = sand.u32 %s146, 1
        %s1365 = scalar_lea.sflag [#allocation6], %s1364
        %s1366 = sand.u32 %s146, 1
        %s1367 = smul.addr %s1366, 16
        %s1368 = scalar_lea.vmem [#allocation10], %s1367
        %s1369 = sand.u32 %s172, 1
        %s1370 = scalar_lea.sflag [#allocation12], %s1369
        %s1371 = sand.u32 %s172, 1
        %s1372 = smul.addr %s1371, 64
        %s1373 = scalar_lea.vmem [#allocation11], %s1372
        // Predicated region
        $region53: #{tpu_custom_call.1} parent=39 // pred_check
          %p1374 = pneg %p156
        $region54: #{tpu_custom_call.1} parent=39 // pred_check_branch
          %1376 = sbr.rel (%p1374) target = $region56
        $region55: #{tpu_custom_call.1} parent=39 // pred_region
          %s1378 = ssub.s32 256, 256
          %1379 = vsyncadd %s1365, %s1378
          %s1380 = smul.addr %s28, 2
          %s1381 = smul.addr %s1380, 128
          %s1382 = scalar_lea.hbm %s5, %s1381
          %s1383 = sshll.u32 %s1368, 4
          %s1384 = int_to_ptr.vmem [resolvable:$true] %s1383
          %1389 = dma.vmem_to_hbm [thread:$0]  %s1384, 256, %s1382, %s1365, 128, 128, 8
        $region56: #{tpu_custom_call.1} parent=39 // pred_fallthru
          _
        // Predicated region
        $region57: #{tpu_custom_call.1} parent=39 // pred_check
          %p1390 = pneg %p182
        $region58: #{tpu_custom_call.1} parent=39 // pred_check_branch
          %1392 = sbr.rel (%p1390) target = $region60
        $region59: #{tpu_custom_call.1} parent=39 // pred_region
          %s1394 = ssub.s32 1024, 1024
          %1395 = vsyncadd %s1370, %s1394
          %s1396 = smul.addr %s28, 8
          %s1397 = smul.addr %s1396, 128
          %s1398 = scalar_lea.hbm %s6, %s1397
          %s1399 = sshll.u32 %s1373, 4
          %s1400 = int_to_ptr.vmem [resolvable:$true] %s1399
          %1405 = dma.vmem_to_hbm [thread:$0]  %s1400, 1024, %s1398, %s1370, 128, 128, 8
        $region60: #{tpu_custom_call.1} parent=39 // pred_fallthru
          _
      $region40: #{tpu_custom_call.1} parent=5 // pred_fallthru
        _
      %p1406 = scmp.le.s32.totalorder 2, %s23
      // Predicated region
      $region61: #{tpu_custom_call.1} parent=5 // pred_check
        %p1407 = pneg %p1406
      $region62: #{tpu_custom_call.1} parent=5 // pred_check_branch
        %1409 = sbr.rel (%p1407) target = $region64
      $region63: #{tpu_custom_call.1} parent=5 // pred_region
        %s1410 = ssub.s32 %s23, 2
        // Predicated region
        $region65: #{tpu_custom_call.1} parent=63 // pred_check
          %p1411 = pneg %p162
        $region66: #{tpu_custom_call.1} parent=63 // pred_check_branch
          %1413 = sbr.rel (%p1411) target = $region68
        $region67: #{tpu_custom_call.1} parent=63 // pred_region
          %s1414 = sand.u32 %s147, 1
          %s1415 = scalar_lea.sflag [#allocation6], %s1414
          %s1416 = sand.u32 %s147, 1
          %s1417 = smul.addr %s1416, 16
          %s1418 = scalar_lea.vmem [#allocation10], %s1417
          %1419 = dma.done %s1415, 256
        $region68: #{tpu_custom_call.1} parent=63 // pred_fallthru
          _
        // Predicated region
        $region69: #{tpu_custom_call.1} parent=63 // pred_check
          %p1420 = pneg %p188
        $region70: #{tpu_custom_call.1} parent=63 // pred_check_branch
          %1422 = sbr.rel (%p1420) target = $region72
        $region71: #{tpu_custom_call.1} parent=63 // pred_region
          %s1423 = sand.u32 %s173, 1
          %s1424 = scalar_lea.sflag [#allocation12], %s1423
          %s1425 = sand.u32 %s173, 1
          %s1426 = smul.addr %s1425, 64
          %s1427 = scalar_lea.vmem [#allocation11], %s1426
          %1428 = dma.done %s1424, 1024
        $region72: #{tpu_custom_call.1} parent=63 // pred_fallthru
          _
      $region64: #{tpu_custom_call.1} parent=5 // pred_fallthru
        _
    $region6: #{tpu_custom_call.1} parent=1 // loop_footer
      %s27 = sadd.s32 1, %s23
    $region7: #{tpu_custom_call.1} parent=1 // loop_footer_branch
      %22 = sbr.rel target = $region3
    $region8: #{tpu_custom_call.1} parent=1 // loop_exit
      _
    %1429 = vsyncpa [#allocation5], 1
    %s1430 = scalar_lea.sflag [#allocation5], 1
    %1431 = vsyncpa %s1430, 1
    %1432 = vsyncpa [#allocation8], 1
    %1433 = vsyncpa [#allocation6], 1
    %s1434 = scalar_lea.sflag [#allocation6], 1
    %1435 = vsyncpa %s1434, 1
    %1436 = vsyncpa [#allocation12], 1
    %s1437 = scalar_lea.sflag [#allocation12], 1
    %1438 = vsyncpa %s1437, 1

</llo_original>
